<compile_context>
chip_gen: v7x
topology: tpu7x:2x2x1
jax: 0.10.0
libtpu: 0.0.40
codegen_flags: <defaults>
</compile_context>

<pallas_src>
import functools
import math

import numpy as np
import jax
import jax.numpy as jnp
from jax.experimental import pallas as pl
from jax.experimental.pallas import tpu as pltpu

# ----------------------- scaled-down hyper-parameters (module __init__) -----------------------
RCUT = 5.0
RCUT_SMTH = 0.5          # unused by this descriptor (as in the torch module)
NTYPES = 2
NUM_PAIR = 2 * NTYPES
EMBED_DIM = 32           # atomic representation dim
KERNEL_NUM = 128         # gaussian kernels
PAIR_DIM = 32            # pair representation dim
LAYER_NUM = 2            # evoformer layers
ATTN_HEAD = 4
PAIR_HIDDEN = 8          # trimul hidden
FFN_DIM = 64
OPM_HID = 8              # outer-product hidden
SEL = 7                  # neighbours per atom
NNEI = SEL
NATOMS = 1 + NNEI        # local cluster size = 8
LN_EPS = 1e-5

# ----------------------- kernel tiling / compiler knobs -----------------------
CLUSTER_BLOCK = 64                     # clusters per grid step; v5e/v6e can raise to 128-256
VMEM_LIMIT_BYTES = 48 * 1024 * 1024    # safe on v7x (64 MiB phys); above v5e/v6e defaults
MASK_NEG = -1e30                       # finite "-inf": exp underflows to 0, never NaN

# packed bias rows / packed layernorm rows
(B_QKV, B_O, B_PB, B_FC1, B_FC2, B_OPMAB, B_OPMO,
 B_TMF, B_TMZ, B_PF1, B_PF2) = range(11)
(LN_ATTN, LN_PB, LN_FFN, LN_OPM, LN_TM, LN_TMOUT, LN_PF) = range(7)

STACK_KEYS = ("ln_g", "ln_b", "bias", "wqkv", "wo", "wpb", "fc1", "fc2",
              "opm_ab", "opm_out", "tm_f", "tm_z", "pf1", "pf2")


# ============================== Pallas kernels ==============================

def _gaussian_pair_kernel(xcol_ref, edge_ref, mean_ref, w1_ref, b1_ref, w2_ref, b2_ref,
                          out_ref, *, inv_std, inv_norm):
    """Fused GaussianEmbedding: gaussian basis (128 kernels) + NonLinearHead + edge feature.

    xcol = mul*dist + bias is precomputed in the wrapper (one stream instead of three)."""
    t = (xcol_ref[...] - mean_ref[...]) * inv_std                          # (R, K) lane-dense
    g = jnp.exp(-0.5 * t * t) * inv_norm                                   # gaussian(x, mean, std)
    h1 = jax.nn.gelu(
        jnp.dot(g.astype(jnp.bfloat16), w1_ref[...],
                preferred_element_type=jnp.float32) + b1_ref[...],
        approximate=True)
    out = (jnp.dot(h1.astype(jnp.bfloat16), w2_ref[...],
                   preferred_element_type=jnp.float32)
           + b2_ref[...] + edge_ref[...].astype(jnp.float32))
    out_ref[...] = out.astype(out_ref.dtype)


def _evoformer_stack_kernel(
        x_ref, pair_ref, atm_ref,
        lng_ref, lnb_ref, bias_ref,
        wqkv_ref, wo_ref, wpb_ref, fc1_ref, fc2_ref,
        opmab_ref, opmo_ref, tmf_ref, tmz_ref, pf1_ref, pf2_ref,
        xo_ref, po_ref, tm_scr):
    """ALL Evoformer3b layers for a block of clusters; x / pair stay resident in VMEM."""
    n = NATOMS
    e = EMBED_DIM
    pd = PAIR_DIM
    h = ATTN_HEAD
    dh = e // h
    ph = PAIR_HIDDEN
    hh = OPM_HID * OPM_HID
    bn = x_ref.shape[0]
    bc = bn // n                         # clusters in this block
    f32 = jnp.float32
    bf16 = jnp.bfloat16

    # tiny constant selector matrices (trace-time iota; stay in vregs)
    fi = jax.lax.broadcasted_iota(jnp.int32, (e, h), 0)
    hi = jax.lax.broadcasted_iota(jnp.int32, (e, h), 1)
    sel = (fi // dh == hi).astype(bf16)                    # (e, h): feature -> its head
    fi2 = jax.lax.broadcasted_iota(jnp.int32, (h, e), 1)
    hi2 = jax.lax.broadcasted_iota(jnp.int32, (h, e), 0)
    sel_t = (fi2 // dh == hi2).astype(bf16)                # (h, e): head -> its features
    ri = jax.lax.broadcasted_iota(jnp.int32, (n * ph, ph), 0)
    ci = jax.lax.broadcasted_iota(jnp.int32, (n * ph, ph), 1)
    sel_k = ((ri % ph) == ci).astype(bf16)                 # (n*ph, ph): trimul sum over k

    # masks rebuilt IN-KERNEL from the (B*n, 1) atom mask (no (B*n*n,1) HBM streams)
    atm = atm_ref[...]                                     # (B*n, 1)  float {0,1}
    atm3 = atm.reshape(bc, n, 1)                           # (B, n, 1)
    key_neg = ((atm3 <= 0.5).astype(f32) * MASK_NEG)[:, None, :, :]      # (B,1,n,1) additive
    pm_col = (atm3[:, :, None, :] * atm3[:, None, :, :]).reshape(bc * n * n, 1)

    x = x_ref[...].astype(f32)                             # (B*n, e) residual stream in f32
    pr = pair_ref[...].astype(f32)                         # (B*n*n, pd)

    for l in range(LAYER_NUM):                             # static unroll; weights stay in VMEM
        lng = lng_ref[l]                                   # (8, 32) packed LN gammas
        lnb = lnb_ref[l]                                   # (8, 32) packed LN betas
        bia = bias_ref[l]                                  # (11, 128) packed biases

        def ln(v, row, width):
            mu = jnp.mean(v, axis=-1, keepdims=True)
            vc = v - mu
            var = jnp.mean(vc * vc, axis=-1, keepdims=True)
            return (vc * jax.lax.rsqrt(var + LN_EPS)) * lng[row:row + 1, :width] \
                + lnb[row:row + 1, :width]

        def mm(a, w_ref, brow, width):
            return jnp.dot(a.astype(bf16), w_ref[l],
                           preferred_element_type=f32) + bia[brow:brow + 1, :width]

        # ---------------- atomic track: pre-LN self-attention with pair bias ----------------
        xn = ln(x, LN_ATTN, e)
        qkv = mm(xn, wqkv_ref, B_QKV, 3 * e)               # fused QKV; q pre-scaled by dh**-0.5
        q = qkv[:, :e]
        k = qkv[:, e:2 * e]
        v = qkv[:, 2 * e:3 * e]
        pbias = mm(ln(pr, LN_PB, pd), wpb_ref, B_PB, h)    # (B*n*n, h)

        qr = q.reshape(bc, n, e)
        kr = k.reshape(bc, n, e)
        vr = v.reshape(bc, n, e)
        prod = (qr[:, :, None, :] * kr[:, None, :, :]).reshape(bc * n * n, e)
        s = jnp.dot(prod.astype(bf16), sel, preferred_element_type=f32)    # per-head scores
        s4 = s.reshape(bc, n, n, h) + pbias.reshape(bc, n, n, h) + key_neg
        mx = jnp.max(s4, axis=2, keepdims=True)
        p = jnp.exp(s4 - mx)
        den = jnp.sum(p, axis=2, keepdims=True)
        p = p * pl.reciprocal(den, approx=True)
        p_e = jnp.dot(p.reshape(bc * n * n, h).astype(bf16), sel_t,
                      preferred_element_type=f32).reshape(bc, n, n, e)
        o = jnp.sum(p_e * vr[:, None, :, :], axis=2).reshape(bc * n, e)
        x = x + mm(o, wo_ref, B_O, e)

        # ---------------- atomic track: feed-forward ----------------
        ff = jax.nn.gelu(mm(ln(x, LN_FFN, e), fc1_ref, B_FC1, FFN_DIM), approximate=True)
        x = x + mm(ff, fc2_ref, B_FC2, e)

        # ---------------- pair track: outer-product update (one lane-dense matmul) ----------
        ab_rep = mm(ln(x, LN_OPM, e), opmab_ref, B_OPMAB, 2 * hh) * atm    # (B*n, 128)
        a3 = ab_rep[:, :hh].reshape(bc, n, hh)
        b3 = ab_rep[:, hh:].reshape(bc, n, hh)
        outer = (a3[:, :, None, :] * b3[:, None, :, :]).reshape(bc * n * n, hh)
        pr = pr + mm(outer, opmo_ref, B_OPMO, pd)

        # ---------------- pair track: triangle multiplication (k packed into lanes) ---------
        t = mm(ln(pr, LN_TM, pd), tmf_ref, B_TMF, pd + 4 * ph)             # gate | ab_p | ab_g
        gte = jax.nn.sigmoid(t[:, :pd])
        ab = t[:, pd:pd + 2 * ph] * jax.nn.sigmoid(t[:, pd + 2 * ph:pd + 4 * ph]) * pm_col
        tm_scr[...] = ab                                                   # stage (B*n*n, 2ph)
        # strided re-reads fold the k axis into lanes: parts[k][m] = ab[(m // n)*n... row (b,i,k)]
        parts = [tm_scr[pl.ds(kk, bc * n, stride=n), :] for kk in range(n)]
        a_pack = jnp.concatenate([pt[:, :ph] for pt in parts], axis=-1)    # (B*n, n*ph) (k,hd)
        b_pack = jnp.concatenate([pt[:, ph:] for pt in parts], axis=-1)
        a_pr = a_pack.reshape(bc, n, n * ph)
        b_pr = b_pack.reshape(bc, n, n * ph)
        prod_t = (a_pr[:, :, None, :] * b_pr[:, None, :, :]).reshape(bc * n * n, n * ph)
        xt = jnp.dot(prod_t.astype(bf16), sel_k, preferred_element_type=f32)   # sum over k
        xt = mm(ln(xt, LN_TMOUT, ph), tmz_ref, B_TMZ, pd)
        pr = pr + gte * xt

        # ---------------- pair track: pair transition (FFN) ----------------
        hp = jax.nn.gelu(mm(ln(pr, LN_PF, pd), pf1_ref, B_PF1, pd), approximate=True)
        pr = pr + mm(hp, pf2_ref, B_PF2, pd)

    xo_ref[...] = x.astype(xo_ref.dtype)
    po_ref[...] = pr.astype(po_ref.dtype)


# ============================== pallas_call wrappers ==============================

def _compiler_params():
    return pltpu.CompilerParams(dimension_semantics=("parallel",),
                                vmem_limit_bytes=VMEM_LIMIT_BYTES)


def pallas_gaussian_pair(xcol2, edge2, params, cb):
    rows = xcol2.shape[0]
    blk = cb * NATOMS * NATOMS
    grid = (rows // blk,)
    std = float(params["gbf_std"])
    inv_std = 1.0 / std
    inv_norm = 1.0 / (math.sqrt(2.0 * math.pi) * std)
    kern = functools.partial(_gaussian_pair_kernel, inv_std=inv_std, inv_norm=inv_norm)
    return pl.pallas_call(
        kern,
        out_shape=jax.ShapeDtypeStruct((rows, PAIR_DIM), jnp.bfloat16),
        grid=grid,
        in_specs=[
            pl.BlockSpec((blk, 1), lambda i: (i, 0)),                     # x = mul*dist + bias
            pl.BlockSpec((blk, PAIR_DIM), lambda i: (i, 0)),              # edge feature (bf16)
            pl.BlockSpec((1, KERNEL_NUM), lambda i: (0, 0)),              # gaussian means
            pl.BlockSpec((KERNEL_NUM, KERNEL_NUM), lambda i: (0, 0)),     # proj w1 (bf16)
            pl.BlockSpec((1, KERNEL_NUM), lambda i: (0, 0)),              # proj b1
            pl.BlockSpec((KERNEL_NUM, PAIR_DIM), lambda i: (0, 0)),       # proj w2 (bf16)
            pl.BlockSpec((1, PAIR_DIM), lambda i: (0, 0)),                # proj b2
        ],
        out_specs=pl.BlockSpec((blk, PAIR_DIM), lambda i: (i, 0)),
        compiler_params=_compiler_params(),
    )(xcol2, edge2, params["gbf_mean2"], params["gbf_w1_bf16"], params["gbf_b1_2"],
      params["gbf_w2_bf16"], params["gbf_b2_2"])


def pallas_evoformer_stack(x2, pair2, atmask2, stack, cb):
    rows_x = x2.shape[0]
    rows_p = pair2.shape[0]
    bx = cb * NATOMS
    bpp = cb * NATOMS * NATOMS
    grid = (rows_x // bx,)

    def const_spec(a):
        nd = a.ndim
        return pl.BlockSpec(a.shape, lambda i, _n=nd: (0,) * _n)

    in_specs = [
        pl.BlockSpec((bx, EMBED_DIM), lambda i: (i, 0)),        # x (bf16)
        pl.BlockSpec((bpp, PAIR_DIM), lambda i: (i, 0)),        # pair (bf16)
        pl.BlockSpec((bx, 1), lambda i: (i, 0)),                # atom mask (f32)
    ] + [const_spec(stack[k]) for k in STACK_KEYS]

    return pl.pallas_call(
        _evoformer_stack_kernel,
        out_shape=(jax.ShapeDtypeStruct((rows_x, EMBED_DIM), jnp.float32),
                   jax.ShapeDtypeStruct((rows_p, PAIR_DIM), jnp.float32)),
        grid=grid,
        in_specs=in_specs,
        out_specs=(pl.BlockSpec((bx, EMBED_DIM), lambda i: (i, 0)),
                   pl.BlockSpec((bpp, PAIR_DIM), lambda i: (i, 0))),
        scratch_shapes=[pltpu.VMEM((bpp, 2 * PAIR_HIDDEN), jnp.float32)],   # trimul staging
        compiler_params=_compiler_params(),
    )(x2, pair2, atmask2, *[stack[k] for k in STACK_KEYS])


# ============================== parameter packing (done ONCE at init) ==============================

def _pack_layer(p):
    """Fuse / pack per-layer weights for the fused evoformer-stack kernel."""
    scale = (EMBED_DIM // ATTN_HEAD) ** -0.5
    wqkv = jnp.concatenate([p["wq"] * scale, p["wk"], p["wv"]], axis=1)
    bqkv = jnp.concatenate([p["bq"] * scale, p["bk"], p["bv"]])

    hid = OPM_HID
    e1 = jnp.asarray(np.repeat(np.eye(hid, dtype=np.float32), hid, axis=1))  # E1[u, u*hid+v] = 1
    e2 = jnp.asarray(np.tile(np.eye(hid, dtype=np.float32), (1, hid)))       # E2[v, u*hid+v] = 1
    opm_a_w = p["opm_in_w"][:, :hid] @ e1
    opm_b_w = p["opm_in_w"][:, hid:] @ e2
    opm_a_b = p["opm_in_b"][:hid] @ e1
    opm_b_b = p["opm_in_b"][hid:] @ e2
    opm_ab_w = jnp.concatenate([opm_a_w, opm_b_w], axis=1)                   # (E, 128) lane-dense
    opm_ab_b = jnp.concatenate([opm_a_b, opm_b_b])

    tm_f_w = jnp.concatenate([p["tm_g_w"], p["tm_ab_p_w"], p["tm_ab_g_w"]], axis=1)
    tm_f_b = jnp.concatenate([p["tm_g_b"], p["tm_ab_p_b"], p["tm_ab_g_b"]])

    def brow(v):
        return jnp.pad(v, (0, 128 - v.shape[0]))

    bias_pack = jnp.stack([
        brow(bqkv), brow(p["bo"]), brow(p["bpb"]), brow(p["fc1_b"]), brow(p["fc2_b"]),
        brow(opm_ab_b), brow(p["opm_out_b"]), brow(tm_f_b), brow(p["tm_z_b"]),
        brow(p["pf1_b"]), brow(p["pf2_b"]),
    ], axis=0)

    lw_ln = max(EMBED_DIM, PAIR_DIM)

    def lrow(v):
        return jnp.pad(v, (0, lw_ln - v.shape[0]))

    ln_g = jnp.stack([
        lrow(p["attn_ln_g"]), lrow(p["pb_ln_g"]), lrow(p["ffn_ln_g"]), lrow(p["opm_ln_g"]),
        lrow(p["tm_ln_g"]), lrow(p["tm_out_ln_g"]), lrow(p["pf_ln_g"]),
        jnp.ones((lw_ln,), jnp.float32),
    ], axis=0)
    ln_b = jnp.stack([
        lrow(p["attn_ln_b"]), lrow(p["pb_ln_b"]), lrow(p["ffn_ln_b"]), lrow(p["opm_ln_b"]),
        lrow(p["tm_ln_b"]), lrow(p["tm_out_ln_b"]), lrow(p["pf_ln_b"]),
        jnp.zeros((lw_ln,), jnp.float32),
    ], axis=0)

    bf = jnp.bfloat16
    return dict(
        ln_g=ln_g, ln_b=ln_b, bias=bias_pack,
        wqkv=wqkv.astype(bf), wo=p["wo"].astype(bf), wpb=p["wpb"].astype(bf),
        fc1=p["fc1_w"].astype(bf), fc2=p["fc2_w"].astype(bf),
        opm_ab=opm_ab_w.astype(bf), opm_out=p["opm_out_w"].astype(bf),
        tm_f=tm_f_w.astype(bf), tm_z=p["tm_z_w"].astype(bf),
        pf1=p["pf1_w"].astype(bf), pf2=p["pf2_w"].astype(bf),
    )


# ============================== DescrptGaussianLcc.forward ==============================

def descrpt_gaussian_lcc_forward(params, extended_coord, nlist, atype, nlist_type,
                                 nlist_loc, atype_tebd, seq_input=None):
    nframes, nloc, nnei = nlist.shape
    n = 1 + nnei
    c = nframes * nloc

    idx = jnp.broadcast_to(jnp.arange(nloc, dtype=nlist.dtype).reshape(1, nloc, 1),
                           (nframes, nloc, 1))
    nlist2 = jnp.concatenate([idx, nlist], axis=-1)
    nlist_loc2 = jnp.concatenate([idx, nlist_loc], axis=-1)
    nlist_type2 = jnp.concatenate([atype.reshape(nframes, nloc, 1), nlist_type], axis=-1)
    nnei2_mask = nlist2 != -1
    nlist2 = nlist2 * nnei2_mask.astype(nlist2.dtype)
    nlist_loc2 = nlist_loc2 * nnei2_mask.astype(nlist_loc2.dtype)
    atom_mask = nnei2_mask.astype(jnp.float32)                              # [f, l, n]

    # gather local-cluster type embeddings
    gather_idx = nlist_loc2.reshape(nframes, -1)
    atom_feature = atype_tebd[jnp.arange(nframes)[:, None], gather_idx].reshape(c, n, EMBED_DIM)
    if seq_input is not None:
        if seq_input.shape[0] == c:
            atom_feature = atom_feature + seq_input
        else:  # [nframes, nloc, tebd_dim] branch
            seq_g = seq_input[jnp.arange(nframes)[:, None], gather_idx].reshape(c, n, EMBED_DIM)
            atom_feature = atom_feature + seq_g
    atom_feature = atom_feature * atom_mask.reshape(c, n, 1)

    # edge types / pair embeddings
    nlist_type2_r = nlist_type2.reshape(c, n)
    edge_type = nlist_type2_r[:, :, None] * (NTYPES + 1) + nlist_type2_r[:, None, :]
    edge_feature = params["edge_type_embedding"][edge_type]                  # [c, n, n, P]
    et0 = jnp.broadcast_to(nlist_type2_r[:, :, None], (c, n, n))
    et1 = jnp.broadcast_to(nlist_type2_r[:, None, :], (c, n, n)) + NTYPES
    mul_w = params["gbf_mul"][:, 0]
    bias_w = params["gbf_bias"][:, 0]
    mul = jnp.abs(mul_w[et0]) + jnp.abs(mul_w[et1])                          # .abs().sum(-2)
    gbias = bias_w[et0] + bias_w[et1]                                        # .sum(-2)

    # coordinates / distances
    cluster_frame = jnp.repeat(jnp.arange(nframes), nloc)
    coord_selected = extended_coord[cluster_frame[:, None], nlist2.reshape(c, n)]  # [c, n, 3]
    delta_pos = coord_selected[:, None, :, :] - coord_selected[:, :, None, :]
    dist = jnp.sqrt(jnp.sum(delta_pos * delta_pos, axis=-1))                 # [c, n, n]
    gbf_x = mul * dist + gbias                                               # packed gaussian arg

    # ---------------- flatten to lane-friendly 2D layouts and pad the cluster dim ----------------
    cb = min(CLUSTER_BLOCK, c)
    c_pad = ((c + cb - 1) // cb) * cb

    def pad_c(arr, rows_per_cluster):
        tgt = c_pad * rows_per_cluster
        if arr.shape[0] == tgt:
            return arr
        return jnp.pad(arr, ((0, tgt - arr.shape[0]), (0, 0)))

    xcol2 = pad_c(gbf_x.reshape(c * n * n, 1), n * n)
    edge2 = pad_c(edge_feature.reshape(c * n * n, PAIR_DIM).astype(jnp.bfloat16), n * n)
    atmask2 = pad_c(atom_mask.reshape(c * n, 1), n)
    x2 = pad_c(atom_feature.reshape(c * n, EMBED_DIM).astype(jnp.bfloat16), n)

    # GaussianEmbedding (atomic_sum_gbf=False: atomic feature unchanged), pair stored bf16
    pair2 = pallas_gaussian_pair(xcol2, edge2, params, cb)

    # Evoformer3bEncoder: ALL layers in one fused kernel (x / pair never round-trip HBM per layer)
    x_out2, pair_out2 = pallas_evoformer_stack(x2, pair2, atmask2, params["stack"], cb)

    output = x_out2[:c * n].reshape(c, n, EMBED_DIM)
    pair = pair_out2[:c * n * n].reshape(c, n, n, PAIR_DIM)
    return output, pair, delta_pos, None


# ============================== deterministic parameter init ==============================

def _init_linear(key, d_in, d_out, scale=0.1):
    k1, k2 = jax.random.split(key)
    w = scale * jax.random.normal(k1, (d_in, d_out), dtype=jnp.float32)
    b = scale * jax.random.normal(k2, (d_out,), dtype=jnp.float32)
    return w, b


def init_params(key):
    keys = iter(jax.random.split(key, 256))
    params = {}

    # nn.Embedding((ntypes+1)^2, pair_embed_dim, padding_idx=(ntypes+1)^2-1)
    n_edge = (NTYPES + 1) * (NTYPES + 1)
    ete = 0.1 * jax.random.normal(next(keys), (n_edge, PAIR_DIM), dtype=jnp.float32)
    params["edge_type_embedding"] = ete.at[n_edge - 1].set(0.0)

    # GaussianKernel: per-pair-type mul / bias embeddings, gaussian means
    params["gbf_mul"] = 1.0 + 0.1 * jax.random.normal(next(keys), (NUM_PAIR + 1, 1), dtype=jnp.float32)
    params["gbf_bias"] = 0.1 * jax.random.normal(next(keys), (NUM_PAIR + 1, 1), dtype=jnp.float32)
    params["gbf_mean"] = jnp.linspace(0.0, RCUT, KERNEL_NUM, dtype=jnp.float32)
    params["gbf_std"] = float(RCUT / (KERNEL_NUM - 1))

    # gbf_proj = NonLinearHead(kernel_num, pair_dim)
    params["gbf_proj_w1"], params["gbf_proj_b1"] = _init_linear(next(keys), KERNEL_NUM, KERNEL_NUM)
    params["gbf_proj_w2"], params["gbf_proj_b2"] = _init_linear(next(keys), KERNEL_NUM, PAIR_DIM)

    layers = []
    for _ in range(LAYER_NUM):
        p = {}
        p["attn_ln_g"] = jnp.ones((EMBED_DIM,), jnp.float32)
        p["attn_ln_b"] = jnp.zeros((EMBED_DIM,), jnp.float32)
        p["wq"], p["bq"] = _init_linear(next(keys), EMBED_DIM, EMBED_DIM)
        p["wk"], p["bk"] = _init_linear(next(keys), EMBED_DIM, EMBED_DIM)
        p["wv"], p["bv"] = _init_linear(next(keys), EMBED_DIM, EMBED_DIM)
        p["wo"], p["bo"] = _init_linear(next(keys), EMBED_DIM, EMBED_DIM)
        p["pb_ln_g"] = jnp.ones((PAIR_DIM,), jnp.float32)
        p["pb_ln_b"] = jnp.zeros((PAIR_DIM,), jnp.float32)
        p["wpb"], p["bpb"] = _init_linear(next(keys), PAIR_DIM, ATTN_HEAD)
        p["ffn_ln_g"] = jnp.ones((EMBED_DIM,), jnp.float32)
        p["ffn_ln_b"] = jnp.zeros((EMBED_DIM,), jnp.float32)
        p["fc1_w"], p["fc1_b"] = _init_linear(next(keys), EMBED_DIM, FFN_DIM)
        p["fc2_w"], p["fc2_b"] = _init_linear(next(keys), FFN_DIM, EMBED_DIM)
        p["opm_ln_g"] = jnp.ones((EMBED_DIM,), jnp.float32)
        p["opm_ln_b"] = jnp.zeros((EMBED_DIM,), jnp.float32)
        p["opm_in_w"], p["opm_in_b"] = _init_linear(next(keys), EMBED_DIM, 2 * OPM_HID)
        p["opm_out_w"], p["opm_out_b"] = _init_linear(next(keys), OPM_HID * OPM_HID, PAIR_DIM)
        p["tm_ln_g"] = jnp.ones((PAIR_DIM,), jnp.float32)
        p["tm_ln_b"] = jnp.zeros((PAIR_DIM,), jnp.float32)
        p["tm_g_w"], p["tm_g_b"] = _init_linear(next(keys), PAIR_DIM, PAIR_DIM)
        p["tm_ab_p_w"], p["tm_ab_p_b"] = _init_linear(next(keys), PAIR_DIM, 2 * PAIR_HIDDEN)
        p["tm_ab_g_w"], p["tm_ab_g_b"] = _init_linear(next(keys), PAIR_DIM, 2 * PAIR_HIDDEN)
        p["tm_out_ln_g"] = jnp.ones((PAIR_HIDDEN,), jnp.float32)
        p["tm_out_ln_b"] = jnp.zeros((PAIR_HIDDEN,), jnp.float32)
        p["tm_z_w"], p["tm_z_b"] = _init_linear(next(keys), PAIR_HIDDEN, PAIR_DIM)
        p["pf_ln_g"] = jnp.ones((PAIR_DIM,), jnp.float32)
        p["pf_ln_b"] = jnp.zeros((PAIR_DIM,), jnp.float32)
        p["pf1_w"], p["pf1_b"] = _init_linear(next(keys), PAIR_DIM, PAIR_DIM)
        p["pf2_w"], p["pf2_b"] = _init_linear(next(keys), PAIR_DIM, PAIR_DIM)
        layers.append(p)
    params["layers"] = layers

    # ---- pack / fuse weights ONCE (hoisted out of the forward path) ----
    layer_packs = [_pack_layer(p) for p in layers]
    params["stack"] = {k: jnp.stack([lp[k] for lp in layer_packs], axis=0)
                       for k in layer_packs[0]}
    params["gbf_mean2"] = params["gbf_mean"].reshape(1, KERNEL_NUM)
    params["gbf_w1_bf16"] = params["gbf_proj_w1"].astype(jnp.bfloat16)
    params["gbf_b1_2"] = params["gbf_proj_b1"].reshape(1, KERNEL_NUM)
    params["gbf_w2_bf16"] = params["gbf_proj_w2"].astype(jnp.bfloat16)
    params["gbf_b2_2"] = params["gbf_proj_b2"].reshape(1, PAIR_DIM)
    return params


# ============================== example run ==============================

if __name__ == "__main__":
    key = jax.random.PRNGKey(0)
    kp, kc, kt, kn, ka, ktb, ks = jax.random.split(key, 7)
    params = init_params(kp)

    nframes, nloc, nall = 2, 4, 6
    extended_coord = 3.0 * jax.random.uniform(kc, (nframes, nall, 3), dtype=jnp.float32)
    extended_atype = jax.random.randint(kt, (nframes, nall), 0, NTYPES)
    atype = extended_atype[:, :nloc]

    nlist = jax.random.randint(kn, (nframes, nloc, NNEI), 0, nall)
    drop = jax.random.uniform(ka, (nframes, nloc, NNEI)) < 0.25
    nlist = jnp.where(drop, -1, nlist)                               # -1 = padded neighbour
    frame3 = jnp.arange(nframes)[:, None, None]
    nlist_type = jnp.where(nlist >= 0,
                           extended_atype[frame3, jnp.clip(nlist, 0, nall - 1)],
                           NTYPES)                                   # padded -> virtual type
    nlist_loc = jnp.where(nlist >= 0, nlist % nloc, -1)

    atype_tebd = 0.1 * jax.random.normal(ktb, (nframes, nloc, EMBED_DIM), dtype=jnp.float32)
    seq_input = 0.1 * jax.random.normal(ks, (nframes * nloc, 1 + NNEI, EMBED_DIM), dtype=jnp.float32)

    output, pair, delta_pos, _ = descrpt_gaussian_lcc_forward(
        params, extended_coord, nlist, atype, nlist_type, nlist_loc, atype_tebd, seq_input)
    jax.block_until_ready((output, pair, delta_pos))

    assert output.shape == (nframes * nloc, 1 + NNEI, EMBED_DIM)
    assert pair.shape == (nframes * nloc, 1 + NNEI, 1 + NNEI, PAIR_DIM)
    assert delta_pos.shape == (nframes * nloc, 1 + NNEI, 1 + NNEI, 3)
    assert bool(jnp.all(jnp.isfinite(output))) and bool(jnp.all(jnp.isfinite(pair)))
    print("KERNEL_OK")
</pallas_src>

<mosaic_0001>
module attributes {stable_mosaic.version = 11 : i64} {
  func.func @_gaussian_pair_kernel(%arg0: i32, %arg1: memref<512x1xf32, #tpu.memory_space<vmem>>, %arg2: memref<512x32xbf16, #tpu.memory_space<vmem>>, %arg3: memref<1x128xf32, #tpu.memory_space<vmem>>, %arg4: memref<128x128xbf16, #tpu.memory_space<vmem>>, %arg5: memref<1x128xf32, #tpu.memory_space<vmem>>, %arg6: memref<128x32xbf16, #tpu.memory_space<vmem>>, %arg7: memref<1x32xf32, #tpu.memory_space<vmem>>, %arg8: memref<512x32xbf16, #tpu.memory_space<vmem>>) attributes {dimension_semantics = [#tpu.dimension_semantics<parallel>], iteration_bounds = array<i64: 1>, scalar_prefetch = 0 : i64, scratch_operands = 0 : i64, tpu.core_type = #tpu.core_type<tc>, window_params = [{transform_indices = @transform_0, window_bounds = array<i64: 512, 1>}, {transform_indices = @transform_1, window_bounds = array<i64: 512, 32>}, {pipeline_mode = #tpu.pipeline_mode<synchronous>, transform_indices = @transform_2, window_bounds = array<i64: 1, 128>}, {pipeline_mode = #tpu.pipeline_mode<synchronous>, transform_indices = @transform_3, window_bounds = array<i64: 128, 128>}, {pipeline_mode = #tpu.pipeline_mode<synchronous>, transform_indices = @transform_4, window_bounds = array<i64: 1, 128>}, {pipeline_mode = #tpu.pipeline_mode<synchronous>, transform_indices = @transform_5, window_bounds = array<i64: 128, 32>}, {pipeline_mode = #tpu.pipeline_mode<synchronous>, transform_indices = @transform_6, window_bounds = array<i64: 1, 32>}, {transform_indices = @transform_7, window_bounds = array<i64: 512, 32>}]} {
    %c0 = arith.constant 0 : index
    %c0_0 = arith.constant 0 : index
    %0 = vector.load %arg1[%c0, %c0_0] : memref<512x1xf32, #tpu.memory_space<vmem>>, vector<512x1xf32>
    %c0_1 = arith.constant 0 : index
    %c0_2 = arith.constant 0 : index
    %1 = vector.load %arg3[%c0_1, %c0_2] : memref<1x128xf32, #tpu.memory_space<vmem>>, vector<1x128xf32>
    %2 = vector.broadcast %0 : vector<512x1xf32> to vector<512x128xf32>
    %3 = vector.broadcast %1 : vector<1x128xf32> to vector<512x128xf32>
    %4 = arith.subf %2, %3 : vector<512x128xf32>
    %cst = arith.constant 2.540000e+01 : f32
    %5 = vector.broadcast %cst : f32 to vector<512x128xf32>
    %6 = arith.mulf %4, %5 : vector<512x128xf32>
    %cst_3 = arith.constant -5.000000e-01 : f32
    %7 = vector.broadcast %cst_3 : f32 to vector<512x128xf32>
    %8 = arith.mulf %7, %6 : vector<512x128xf32>
    %9 = arith.mulf %8, %6 : vector<512x128xf32>
    %10 = math.exp %9 : vector<512x128xf32>
    %cst_4 = arith.constant 10.1331339 : f32
    %11 = vector.broadcast %cst_4 : f32 to vector<512x128xf32>
    %12 = arith.mulf %10, %11 : vector<512x128xf32>
    %13 = arith.truncf %12 : vector<512x128xf32> to vector<512x128xbf16>
    %c0_5 = arith.constant 0 : index
    %c0_6 = arith.constant 0 : index
    %14 = vector.load %arg4[%c0_5, %c0_6] : memref<128x128xbf16, #tpu.memory_space<vmem>>, vector<128x128xbf16>
    %cst_7 = arith.constant dense<0.000000e+00> : vector<512x128xf32>
    %15 = tpu.matmul %13, %14, %cst_7 {dimension_numbers = #tpu.dot_dimension_numbers<[1], [0], [0], [1], [0, 0, 1, 1], [], []>} : vector<512x128xbf16>, vector<128x128xbf16>, vector<512x128xf32> -> vector<512x128xf32>
    %c0_8 = arith.constant 0 : index
    %c0_9 = arith.constant 0 : index
    %16 = vector.load %arg5[%c0_8, %c0_9] : memref<1x128xf32, #tpu.memory_space<vmem>>, vector<1x128xf32>
    %17 = vector.broadcast %16 : vector<1x128xf32> to vector<512x128xf32>
    %18 = arith.addf %15, %17 : vector<512x128xf32>
    %19 = arith.mulf %18, %18 : vector<512x128xf32>
    %20 = arith.mulf %18, %19 : vector<512x128xf32>
    %cst_10 = arith.constant 4.471500e-02 : f32
    %21 = vector.broadcast %cst_10 : f32 to vector<512x128xf32>
    %22 = arith.mulf %21, %20 : vector<512x128xf32>
    %23 = arith.addf %18, %22 : vector<512x128xf32>
    %cst_11 = arith.constant 0.797884583 : f32
    %24 = vector.broadcast %cst_11 : f32 to vector<512x128xf32>
    %25 = arith.mulf %24, %23 : vector<512x128xf32>
    %26 = math.tanh %25 : vector<512x128xf32>
    %cst_12 = arith.constant 1.000000e+00 : f32
    %27 = vector.broadcast %cst_12 : f32 to vector<512x128xf32>
    %28 = arith.addf %27, %26 : vector<512x128xf32>
    %cst_13 = arith.constant 5.000000e-01 : f32
    %29 = vector.broadcast %cst_13 : f32 to vector<512x128xf32>
    %30 = arith.mulf %29, %28 : vector<512x128xf32>
    %31 = arith.mulf %18, %30 : vector<512x128xf32>
    %32 = arith.truncf %31 : vector<512x128xf32> to vector<512x128xbf16>
    %c0_14 = arith.constant 0 : index
    %c0_15 = arith.constant 0 : index
    %33 = vector.load %arg6[%c0_14, %c0_15] : memref<128x32xbf16, #tpu.memory_space<vmem>>, vector<128x32xbf16>
    %cst_16 = arith.constant dense<0.000000e+00> : vector<512x32xf32>
    %34 = tpu.matmul %32, %33, %cst_16 {dimension_numbers = #tpu.dot_dimension_numbers<[1], [0], [0], [1], [0, 0, 1, 1], [], []>} : vector<512x128xbf16>, vector<128x32xbf16>, vector<512x32xf32> -> vector<512x32xf32>
    %c0_17 = arith.constant 0 : index
    %c0_18 = arith.constant 0 : index
    %35 = vector.load %arg7[%c0_17, %c0_18] : memref<1x32xf32, #tpu.memory_space<vmem>>, vector<1x32xf32>
    %36 = vector.broadcast %35 : vector<1x32xf32> to vector<512x32xf32>
    %37 = arith.addf %34, %36 : vector<512x32xf32>
    %c0_19 = arith.constant 0 : index
    %c0_20 = arith.constant 0 : index
    %38 = vector.load %arg2[%c0_19, %c0_20] : memref<512x32xbf16, #tpu.memory_space<vmem>>, vector<512x32xbf16>
    %39 = arith.extf %38 : vector<512x32xbf16> to vector<512x32xf32>
    %40 = arith.addf %37, %39 : vector<512x32xf32>
    %41 = arith.truncf %40 : vector<512x32xf32> to vector<512x32xbf16>
    %c0_21 = arith.constant 0 : index
    %c0_22 = arith.constant 0 : index
    %42 = vector.load %arg8[%c0_21, %c0_22] : memref<512x32xbf16, #tpu.memory_space<vmem>>, vector<512x32xbf16>
    tpu.vector_store %arg8[%c0_21, %c0_22], %41 {strides = array<i32>} : memref<512x32xbf16, #tpu.memory_space<vmem>>, vector<512x32xbf16>,
    return
  }
  func.func @transform_0(%arg0: i32) -> (i32, i32) {
    %c0_i32 = arith.constant 0 : i32
    %c0_i32_0 = arith.constant 0 : i32
    return %arg0, %c0_i32 : i32, i32
  }
  func.func @transform_1(%arg0: i32) -> (i32, i32) {
    %c0_i32 = arith.constant 0 : i32
    %c0_i32_0 = arith.constant 0 : i32
    return %arg0, %c0_i32 : i32, i32
  }
  func.func @transform_2(%arg0: i32) -> (i32, i32) {
    %c0_i32 = arith.constant 0 : i32
    %c0_i32_0 = arith.constant 0 : i32
    %c0_i32_1 = arith.constant 0 : i32
    return %c0_i32, %c0_i32_0 : i32, i32
  }
  func.func @transform_3(%arg0: i32) -> (i32, i32) {
    %c0_i32 = arith.constant 0 : i32
    %c0_i32_0 = arith.constant 0 : i32
    %c0_i32_1 = arith.constant 0 : i32
    return %c0_i32, %c0_i32_0 : i32, i32
  }
  func.func @transform_4(%arg0: i32) -> (i32, i32) {
    %c0_i32 = arith.constant 0 : i32
    %c0_i32_0 = arith.constant 0 : i32
    %c0_i32_1 = arith.constant 0 : i32
    return %c0_i32, %c0_i32_0 : i32, i32
  }
  func.func @transform_5(%arg0: i32) -> (i32, i32) {
    %c0_i32 = arith.constant 0 : i32
    %c0_i32_0 = arith.constant 0 : i32
    %c0_i32_1 = arith.constant 0 : i32
    return %c0_i32, %c0_i32_0 : i32, i32
  }
  func.func @transform_6(%arg0: i32) -> (i32, i32) {
    %c0_i32 = arith.constant 0 : i32
    %c0_i32_0 = arith.constant 0 : i32
    %c0_i32_1 = arith.constant 0 : i32
    return %c0_i32, %c0_i32_0 : i32, i32
  }
  func.func @transform_7(%arg0: i32) -> (i32, i32) {
    %c0_i32 = arith.constant 0 : i32
    %c0_i32_0 = arith.constant 0 : i32
    return %arg0, %c0_i32 : i32, i32
  }
}

</mosaic_0001>

<llo_original>
// kernel: tpu_custom_call.1
$region0: #{tpu_custom_call.1}
  #allocation0 [shape = 'u32[]', space=smem, size = 0x4, offset = 0x4, fixed_abs, tag = 'smem constant byte address 0x4 - core index']
  #allocation1 [shape = 'u32[144,128]{1,0:T(1,128)}', space=vmem, size = 0x12000, scoped, tag = 'internal scratch']
  %s0 = inlined_call_operand.vmem [shape: f32[512,1], index: 0, kind: input, shape index: {}]
  %s1 = inlined_call_operand.vmem [shape: bf16[512,32], index: 1, kind: input, shape index: {}]
  %s2 = inlined_call_operand.vmem [shape: f32[1,128], index: 2, kind: input, shape index: {}]
  %s3 = inlined_call_operand.vmem [shape: bf16[128,128], index: 3, kind: input, shape index: {}]
  %s4 = inlined_call_operand.vmem [shape: f32[1,128], index: 4, kind: input, shape index: {}]
  %s5 = inlined_call_operand.vmem [shape: bf16[128,32], index: 5, kind: input, shape index: {}]
  %s6 = inlined_call_operand.vmem [shape: f32[1,32], index: 6, kind: input, shape index: {}]
  %s7 = inlined_call_operand.vmem [shape: bf16[512,32], index: 7, kind: output, shape index: {}]
  %s8 = sld [smem:[#allocation0]]
  $region38: #{tpu_custom_call.1} parent=0
    _
  %s10 = ssub.s32 1, %s8
  %s11 = scalar_select 0, %s10, %s8
  // Predicated region
  $region2: #{tpu_custom_call.1} parent=0 // pred_check
    _
  $region3: #{tpu_custom_call.1} parent=0 // pred_check_branch
    %13 = sbr.rel (0) target = $region5
  $region4: #{tpu_custom_call.1} parent=0 // pred_region
    _
  $region5: #{tpu_custom_call.1} parent=0 // pred_fallthru
    _
  // Predicated region
  $region6: #{tpu_custom_call.1} parent=0 // pred_check
    _
  $region7: #{tpu_custom_call.1} parent=0 // pred_check_branch
    %15 = sbr.rel (0) target = $region9
  $region8: #{tpu_custom_call.1} parent=0 // pred_region
    _
  $region9: #{tpu_custom_call.1} parent=0 // pred_fallthru
    _
  // Predicated region
  $region10: #{tpu_custom_call.1} parent=0 // pred_check
    _
  $region11: #{tpu_custom_call.1} parent=0 // pred_check_branch
    %17 = sbr.rel (0) target = $region13
  $region12: #{tpu_custom_call.1} parent=0 // pred_region
    _
  $region13: #{tpu_custom_call.1} parent=0 // pred_fallthru
    _
  // Predicated region
  $region14: #{tpu_custom_call.1} parent=0 // pred_check
    _
  $region15: #{tpu_custom_call.1} parent=0 // pred_check_branch
    %19 = sbr.rel (0) target = $region17
  $region16: #{tpu_custom_call.1} parent=0 // pred_region
    _
  $region17: #{tpu_custom_call.1} parent=0 // pred_fallthru
    _
  // Predicated region
  $region18: #{tpu_custom_call.1} parent=0 // pred_check
    _
  $region19: #{tpu_custom_call.1} parent=0 // pred_check_branch
    %21 = sbr.rel (0) target = $region21
  $region20: #{tpu_custom_call.1} parent=0 // pred_region
    _
  $region21: #{tpu_custom_call.1} parent=0 // pred_fallthru
    _
  // Predicated region
  $region22: #{tpu_custom_call.1} parent=0 // pred_check
    _
  $region23: #{tpu_custom_call.1} parent=0 // pred_check_branch
    %23 = sbr.rel (0) target = $region25
  $region24: #{tpu_custom_call.1} parent=0 // pred_region
    _
  $region25: #{tpu_custom_call.1} parent=0 // pred_fallthru
    _
  // Predicated region
  $region26: #{tpu_custom_call.1} parent=0 // pred_check
    _
  $region27: #{tpu_custom_call.1} parent=0 // pred_check_branch
    %25 = sbr.rel (0) target = $region29
  $region28: #{tpu_custom_call.1} parent=0 // pred_region
    _
  $region29: #{tpu_custom_call.1} parent=0 // pred_fallthru
    _
  %v27 = vld [vmem:[%s0] sm:$0xff]
  %v28 = vld [vmem:[%s0 + $0x8] sm:$0xff]
  %v29 = vld [vmem:[%s0 + $0x10] sm:$0xff]
  %v30 = vld [vmem:[%s0 + $0x18] sm:$0xff]
  %v31 = vld [vmem:[%s0 + $0x20] sm:$0xff]
  %v32 = vld [vmem:[%s0 + $0x28] sm:$0xff]
  %v33 = vld [vmem:[%s0 + $0x30] sm:$0xff]
  %v34 = vld [vmem:[%s0 + $0x38] sm:$0xff]
  %v35 = vld [vmem:[%s0 + $0x40] sm:$0xff]
  %v36 = vld [vmem:[%s0 + $0x48] sm:$0xff]
  %v37 = vld [vmem:[%s0 + $0x50] sm:$0xff]
  %v38 = vld [vmem:[%s0 + $0x58] sm:$0xff]
  %v39 = vld [vmem:[%s0 + $0x60] sm:$0xff]
  %v40 = vld [vmem:[%s0 + $0x68] sm:$0xff]
  %v41 = vld [vmem:[%s0 + $0x70] sm:$0xff]
  %v42 = vld [vmem:[%s0 + $0x78] sm:$0xff]
  %v43 = vld [vmem:[%s0 + $0x80] sm:$0xff]
  %v44 = vld [vmem:[%s0 + $0x88] sm:$0xff]
  %v45 = vld [vmem:[%s0 + $0x90] sm:$0xff]
  %v46 = vld [vmem:[%s0 + $0x98] sm:$0xff]
  %v47 = vld [vmem:[%s0 + $0xa0] sm:$0xff]
  %v48 = vld [vmem:[%s0 + $0xa8] sm:$0xff]
  %v49 = vld [vmem:[%s0 + $0xb0] sm:$0xff]
  %v50 = vld [vmem:[%s0 + $0xb8] sm:$0xff]
  %v51 = vld [vmem:[%s0 + $0xc0] sm:$0xff]
  %v52 = vld [vmem:[%s0 + $0xc8] sm:$0xff]
  %v53 = vld [vmem:[%s0 + $0xd0] sm:$0xff]
  %v54 = vld [vmem:[%s0 + $0xd8] sm:$0xff]
  %v55 = vld [vmem:[%s0 + $0xe0] sm:$0xff]
  %v56 = vld [vmem:[%s0 + $0xe8] sm:$0xff]
  %v57 = vld [vmem:[%s0 + $0xf0] sm:$0xff]
  %v58 = vld [vmem:[%s0 + $0xf8] sm:$0xff]
  %v59 = vld [vmem:[%s0 + $0x100] sm:$0xff]
  %v60 = vld [vmem:[%s0 + $0x108] sm:$0xff]
  %v61 = vld [vmem:[%s0 + $0x110] sm:$0xff]
  %v62 = vld [vmem:[%s0 + $0x118] sm:$0xff]
  %v63 = vld [vmem:[%s0 + $0x120] sm:$0xff]
  %v64 = vld [vmem:[%s0 + $0x128] sm:$0xff]
  %v65 = vld [vmem:[%s0 + $0x130] sm:$0xff]
  %v66 = vld [vmem:[%s0 + $0x138] sm:$0xff]
  %v67 = vld [vmem:[%s0 + $0x140] sm:$0xff]
  %v68 = vld [vmem:[%s0 + $0x148] sm:$0xff]
  %v69 = vld [vmem:[%s0 + $0x150] sm:$0xff]
  %v70 = vld [vmem:[%s0 + $0x158] sm:$0xff]
  %v71 = vld [vmem:[%s0 + $0x160] sm:$0xff]
  %v72 = vld [vmem:[%s0 + $0x168] sm:$0xff]
  %v73 = vld [vmem:[%s0 + $0x170] sm:$0xff]
  %v74 = vld [vmem:[%s0 + $0x178] sm:$0xff]
  %v75 = vld [vmem:[%s0 + $0x180] sm:$0xff]
  %v76 = vld [vmem:[%s0 + $0x188] sm:$0xff]
  %v77 = vld [vmem:[%s0 + $0x190] sm:$0xff]
  %v78 = vld [vmem:[%s0 + $0x198] sm:$0xff]
  %v79 = vld [vmem:[%s0 + $0x1a0] sm:$0xff]
  %v80 = vld [vmem:[%s0 + $0x1a8] sm:$0xff]
  %v81 = vld [vmem:[%s0 + $0x1b0] sm:$0xff]
  %v82 = vld [vmem:[%s0 + $0x1b8] sm:$0xff]
  %v83 = vld [vmem:[%s0 + $0x1c0] sm:$0xff]
  %v84 = vld [vmem:[%s0 + $0x1c8] sm:$0xff]
  %v85 = vld [vmem:[%s0 + $0x1d0] sm:$0xff]
  %v86 = vld [vmem:[%s0 + $0x1d8] sm:$0xff]
  %v87 = vld [vmem:[%s0 + $0x1e0] sm:$0xff]
  %v88 = vld [vmem:[%s0 + $0x1e8] sm:$0xff]
  %v89 = vld [vmem:[%s0 + $0x1f0] sm:$0xff]
  %v90 = vld [vmem:[%s0 + $0x1f8] sm:$0xff]
  %v91 = vld [vmem:[%s2] sm:$0x1]
  %93 = vset.pattern.permute.xlu0 0
  %94 = vperm.xlu0 %93, %v27
  %v95 = vpop.permute.xlu0 %94
  %98 = vset.pattern.permute.xlu0 0
  %99 = vperm.xlu0 %98, %v28
  %v100 = vpop.permute.xlu0 %99
  %103 = vset.pattern.permute.xlu0 0
  %104 = vperm.xlu0 %103, %v29
  %v105 = vpop.permute.xlu0 %104
  %108 = vset.pattern.permute.xlu0 0
  %109 = vperm.xlu0 %108, %v30
  %v110 = vpop.permute.xlu0 %109
  %113 = vset.pattern.permute.xlu0 0
  %114 = vperm.xlu0 %113, %v31
  %v115 = vpop.permute.xlu0 %114
  %118 = vset.pattern.permute.xlu0 0
  %119 = vperm.xlu0 %118, %v32
  %v120 = vpop.permute.xlu0 %119
  %123 = vset.pattern.permute.xlu0 0
  %124 = vperm.xlu0 %123, %v33
  %v125 = vpop.permute.xlu0 %124
  %128 = vset.pattern.permute.xlu0 0
  %129 = vperm.xlu0 %128, %v34
  %v130 = vpop.permute.xlu0 %129
  %133 = vset.pattern.permute.xlu0 0
  %134 = vperm.xlu0 %133, %v35
  %v135 = vpop.permute.xlu0 %134
  %138 = vset.pattern.permute.xlu0 0
  %139 = vperm.xlu0 %138, %v36
  %v140 = vpop.permute.xlu0 %139
  %143 = vset.pattern.permute.xlu0 0
  %144 = vperm.xlu0 %143, %v37
  %v145 = vpop.permute.xlu0 %144
  %148 = vset.pattern.permute.xlu0 0
  %149 = vperm.xlu0 %148, %v38
  %v150 = vpop.permute.xlu0 %149
  %153 = vset.pattern.permute.xlu0 0
  %154 = vperm.xlu0 %153, %v39
  %v155 = vpop.permute.xlu0 %154
  %158 = vset.pattern.permute.xlu0 0
  %159 = vperm.xlu0 %158, %v40
  %v160 = vpop.permute.xlu0 %159
  %163 = vset.pattern.permute.xlu0 0
  %164 = vperm.xlu0 %163, %v41
  %v165 = vpop.permute.xlu0 %164
  %168 = vset.pattern.permute.xlu0 0
  %169 = vperm.xlu0 %168, %v42
  %v170 = vpop.permute.xlu0 %169
  %173 = vset.pattern.permute.xlu0 0
  %174 = vperm.xlu0 %173, %v43
  %v175 = vpop.permute.xlu0 %174
  %178 = vset.pattern.permute.xlu0 0
  %179 = vperm.xlu0 %178, %v44
  %v180 = vpop.permute.xlu0 %179
  %183 = vset.pattern.permute.xlu0 0
  %184 = vperm.xlu0 %183, %v45
  %v185 = vpop.permute.xlu0 %184
  %188 = vset.pattern.permute.xlu0 0
  %189 = vperm.xlu0 %188, %v46
  %v190 = vpop.permute.xlu0 %189
  %193 = vset.pattern.permute.xlu0 0
  %194 = vperm.xlu0 %193, %v47
  %v195 = vpop.permute.xlu0 %194
  %198 = vset.pattern.permute.xlu0 0
  %199 = vperm.xlu0 %198, %v48
  %v200 = vpop.permute.xlu0 %199
  %203 = vset.pattern.permute.xlu0 0
  %204 = vperm.xlu0 %203, %v49
  %v205 = vpop.permute.xlu0 %204
  %208 = vset.pattern.permute.xlu0 0
  %209 = vperm.xlu0 %208, %v50
  %v210 = vpop.permute.xlu0 %209
  %213 = vset.pattern.permute.xlu0 0
  %214 = vperm.xlu0 %213, %v51
  %v215 = vpop.permute.xlu0 %214
  %218 = vset.pattern.permute.xlu0 0
  %219 = vperm.xlu0 %218, %v52
  %v220 = vpop.permute.xlu0 %219
  %223 = vset.pattern.permute.xlu0 0
  %224 = vperm.xlu0 %223, %v53
  %v225 = vpop.permute.xlu0 %224
  %228 = vset.pattern.permute.xlu0 0
  %229 = vperm.xlu0 %228, %v54
  %v230 = vpop.permute.xlu0 %229
  %233 = vset.pattern.permute.xlu0 0
  %234 = vperm.xlu0 %233, %v55
  %v235 = vpop.permute.xlu0 %234
  %238 = vset.pattern.permute.xlu0 0
  %239 = vperm.xlu0 %238, %v56
  %v240 = vpop.permute.xlu0 %239
  %243 = vset.pattern.permute.xlu0 0
  %244 = vperm.xlu0 %243, %v57
  %v245 = vpop.permute.xlu0 %244
  %248 = vset.pattern.permute.xlu0 0
  %249 = vperm.xlu0 %248, %v58
  %v250 = vpop.permute.xlu0 %249
  %253 = vset.pattern.permute.xlu0 0
  %254 = vperm.xlu0 %253, %v59
  %v255 = vpop.permute.xlu0 %254
  %258 = vset.pattern.permute.xlu0 0
  %259 = vperm.xlu0 %258, %v60
  %v260 = vpop.permute.xlu0 %259
  %263 = vset.pattern.permute.xlu0 0
  %264 = vperm.xlu0 %263, %v61
  %v265 = vpop.permute.xlu0 %264
  %268 = vset.pattern.permute.xlu0 0
  %269 = vperm.xlu0 %268, %v62
  %v270 = vpop.permute.xlu0 %269
  %273 = vset.pattern.permute.xlu0 0
  %274 = vperm.xlu0 %273, %v63
  %v275 = vpop.permute.xlu0 %274
  %278 = vset.pattern.permute.xlu0 0
  %279 = vperm.xlu0 %278, %v64
  %v280 = vpop.permute.xlu0 %279
  %283 = vset.pattern.permute.xlu0 0
  %284 = vperm.xlu0 %283, %v65
  %v285 = vpop.permute.xlu0 %284
  %288 = vset.pattern.permute.xlu0 0
  %289 = vperm.xlu0 %288, %v66
  %v290 = vpop.permute.xlu0 %289
  %293 = vset.pattern.permute.xlu0 0
  %294 = vperm.xlu0 %293, %v67
  %v295 = vpop.permute.xlu0 %294
  %298 = vset.pattern.permute.xlu0 0
  %299 = vperm.xlu0 %298, %v68
  %v300 = vpop.permute.xlu0 %299
  %303 = vset.pattern.permute.xlu0 0
  %304 = vperm.xlu0 %303, %v69
  %v305 = vpop.permute.xlu0 %304
  %308 = vset.pattern.permute.xlu0 0
  %309 = vperm.xlu0 %308, %v70
  %v310 = vpop.permute.xlu0 %309
  %313 = vset.pattern.permute.xlu0 0
  %314 = vperm.xlu0 %313, %v71
  %v315 = vpop.permute.xlu0 %314
  %318 = vset.pattern.permute.xlu0 0
  %319 = vperm.xlu0 %318, %v72
  %v320 = vpop.permute.xlu0 %319
  %323 = vset.pattern.permute.xlu0 0
  %324 = vperm.xlu0 %323, %v73
  %v325 = vpop.permute.xlu0 %324
  %328 = vset.pattern.permute.xlu0 0
  %329 = vperm.xlu0 %328, %v74
  %v330 = vpop.permute.xlu0 %329
  %333 = vset.pattern.permute.xlu0 0
  %334 = vperm.xlu0 %333, %v75
  %v335 = vpop.permute.xlu0 %334
  %338 = vset.pattern.permute.xlu0 0
  %339 = vperm.xlu0 %338, %v76
  %v340 = vpop.permute.xlu0 %339
  %343 = vset.pattern.permute.xlu0 0
  %344 = vperm.xlu0 %343, %v77
  %v345 = vpop.permute.xlu0 %344
  %348 = vset.pattern.permute.xlu0 0
  %349 = vperm.xlu0 %348, %v78
  %v350 = vpop.permute.xlu0 %349
  %353 = vset.pattern.permute.xlu0 0
  %354 = vperm.xlu0 %353, %v79
  %v355 = vpop.permute.xlu0 %354
  %358 = vset.pattern.permute.xlu0 0
  %359 = vperm.xlu0 %358, %v80
  %v360 = vpop.permute.xlu0 %359
  %363 = vset.pattern.permute.xlu0 0
  %364 = vperm.xlu0 %363, %v81
  %v365 = vpop.permute.xlu0 %364
  %368 = vset.pattern.permute.xlu0 0
  %369 = vperm.xlu0 %368, %v82
  %v370 = vpop.permute.xlu0 %369
  %373 = vset.pattern.permute.xlu0 0
  %374 = vperm.xlu0 %373, %v83
  %v375 = vpop.permute.xlu0 %374
  %378 = vset.pattern.permute.xlu0 0
  %379 = vperm.xlu0 %378, %v84
  %v380 = vpop.permute.xlu0 %379
  %383 = vset.pattern.permute.xlu0 0
  %384 = vperm.xlu0 %383, %v85
  %v385 = vpop.permute.xlu0 %384
  %388 = vset.pattern.permute.xlu0 0
  %389 = vperm.xlu0 %388, %v86
  %v390 = vpop.permute.xlu0 %389
  %393 = vset.pattern.permute.xlu0 0
  %394 = vperm.xlu0 %393, %v87
  %v395 = vpop.permute.xlu0 %394
  %398 = vset.pattern.permute.xlu0 0
  %399 = vperm.xlu0 %398, %v88
  %v400 = vpop.permute.xlu0 %399
  %403 = vset.pattern.permute.xlu0 0
  %404 = vperm.xlu0 %403, %v89
  %v405 = vpop.permute.xlu0 %404
  %408 = vset.pattern.permute.xlu0 0
  %409 = vperm.xlu0 %408, %v90
  %v410 = vpop.permute.xlu0 %409
  %v413 = vlaneseq
  %v414 = vshrl.u32 %v413, 7
  %v415 = vsub.s32 0, %v414
  %v416 = vrot.slane %v91, %v415
  %v418 = vsub.f32 %v95, %v416
  %v419 = vsub.f32 %v100, %v416
  %v420 = vsub.f32 %v105, %v416
  %v421 = vsub.f32 %v110, %v416
  %v422 = vsub.f32 %v115, %v416
  %v423 = vsub.f32 %v120, %v416
  %v424 = vsub.f32 %v125, %v416
  %v425 = vsub.f32 %v130, %v416
  %v426 = vsub.f32 %v135, %v416
  %v427 = vsub.f32 %v140, %v416
  %v428 = vsub.f32 %v145, %v416
  %v429 = vsub.f32 %v150, %v416
  %v430 = vsub.f32 %v155, %v416
  %v431 = vsub.f32 %v160, %v416
  %v432 = vsub.f32 %v165, %v416
  %v433 = vsub.f32 %v170, %v416
  %v434 = vsub.f32 %v175, %v416
  %v435 = vsub.f32 %v180, %v416
  %v436 = vsub.f32 %v185, %v416
  %v437 = vsub.f32 %v190, %v416
  %v438 = vsub.f32 %v195, %v416
  %v439 = vsub.f32 %v200, %v416
  %v440 = vsub.f32 %v205, %v416
  %v441 = vsub.f32 %v210, %v416
  %v442 = vsub.f32 %v215, %v416
  %v443 = vsub.f32 %v220, %v416
  %v444 = vsub.f32 %v225, %v416
  %v445 = vsub.f32 %v230, %v416
  %v446 = vsub.f32 %v235, %v416
  %v447 = vsub.f32 %v240, %v416
  %v448 = vsub.f32 %v245, %v416
  %v449 = vsub.f32 %v250, %v416
  %v450 = vsub.f32 %v255, %v416
  %v451 = vsub.f32 %v260, %v416
  %v452 = vsub.f32 %v265, %v416
  %v453 = vsub.f32 %v270, %v416
  %v454 = vsub.f32 %v275, %v416
  %v455 = vsub.f32 %v280, %v416
  %v456 = vsub.f32 %v285, %v416
  %v457 = vsub.f32 %v290, %v416
  %v458 = vsub.f32 %v295, %v416
  %v459 = vsub.f32 %v300, %v416
  %v460 = vsub.f32 %v305, %v416
  %v461 = vsub.f32 %v310, %v416
  %v462 = vsub.f32 %v315, %v416
  %v463 = vsub.f32 %v320, %v416
  %v464 = vsub.f32 %v325, %v416
  %v465 = vsub.f32 %v330, %v416
  %v466 = vsub.f32 %v335, %v416
  %v467 = vsub.f32 %v340, %v416
  %v468 = vsub.f32 %v345, %v416
  %v469 = vsub.f32 %v350, %v416
  %v470 = vsub.f32 %v355, %v416
  %v471 = vsub.f32 %v360, %v416
  %v472 = vsub.f32 %v365, %v416
  %v473 = vsub.f32 %v370, %v416
  %v474 = vsub.f32 %v375, %v416
  %v475 = vsub.f32 %v380, %v416
  %v476 = vsub.f32 %v385, %v416
  %v477 = vsub.f32 %v390, %v416
  %v478 = vsub.f32 %v395, %v416
  %v479 = vsub.f32 %v400, %v416
  %v480 = vsub.f32 %v405, %v416
  %v481 = vsub.f32 %v410, %v416
  %v482 = vmul.f32 %v418, 25.4
  %v483 = vmul.f32 %v419, 25.4
  %v484 = vmul.f32 %v420, 25.4
  %v485 = vmul.f32 %v421, 25.4
  %v486 = vmul.f32 %v422, 25.4
  %v487 = vmul.f32 %v423, 25.4
  %v488 = vmul.f32 %v424, 25.4
  %v489 = vmul.f32 %v425, 25.4
  %v490 = vmul.f32 %v426, 25.4
  %v491 = vmul.f32 %v427, 25.4
  %v492 = vmul.f32 %v428, 25.4
  %v493 = vmul.f32 %v429, 25.4
  %v494 = vmul.f32 %v430, 25.4
  %v495 = vmul.f32 %v431, 25.4
  %v496 = vmul.f32 %v432, 25.4
  %v497 = vmul.f32 %v433, 25.4
  %v498 = vmul.f32 %v434, 25.4
  %v499 = vmul.f32 %v435, 25.4
  %v500 = vmul.f32 %v436, 25.4
  %v501 = vmul.f32 %v437, 25.4
  %v502 = vmul.f32 %v438, 25.4
  %v503 = vmul.f32 %v439, 25.4
  %v504 = vmul.f32 %v440, 25.4
  %v505 = vmul.f32 %v441, 25.4
  %v506 = vmul.f32 %v442, 25.4
  %v507 = vmul.f32 %v443, 25.4
  %v508 = vmul.f32 %v444, 25.4
  %v509 = vmul.f32 %v445, 25.4
  %v510 = vmul.f32 %v446, 25.4
  %v511 = vmul.f32 %v447, 25.4
  %v512 = vmul.f32 %v448, 25.4
  %v513 = vmul.f32 %v449, 25.4
  %v514 = vmul.f32 %v450, 25.4
  %v515 = vmul.f32 %v451, 25.4
  %v516 = vmul.f32 %v452, 25.4
  %v517 = vmul.f32 %v453, 25.4
  %v518 = vmul.f32 %v454, 25.4
  %v519 = vmul.f32 %v455, 25.4
  %v520 = vmul.f32 %v456, 25.4
  %v521 = vmul.f32 %v457, 25.4
  %v522 = vmul.f32 %v458, 25.4
  %v523 = vmul.f32 %v459, 25.4
  %v524 = vmul.f32 %v460, 25.4
  %v525 = vmul.f32 %v461, 25.4
  %v526 = vmul.f32 %v462, 25.4
  %v527 = vmul.f32 %v463, 25.4
  %v528 = vmul.f32 %v464, 25.4
  %v529 = vmul.f32 %v465, 25.4
  %v530 = vmul.f32 %v466, 25.4
  %v531 = vmul.f32 %v467, 25.4
  %v532 = vmul.f32 %v468, 25.4
  %v533 = vmul.f32 %v469, 25.4
  %v534 = vmul.f32 %v470, 25.4
  %v535 = vmul.f32 %v471, 25.4
  %v536 = vmul.f32 %v472, 25.4
  %v537 = vmul.f32 %v473, 25.4
  %v538 = vmul.f32 %v474, 25.4
  %v539 = vmul.f32 %v475, 25.4
  %v540 = vmul.f32 %v476, 25.4
  %v541 = vmul.f32 %v477, 25.4
  %v542 = vmul.f32 %v478, 25.4
  %v543 = vmul.f32 %v479, 25.4
  %v544 = vmul.f32 %v480, 25.4
  %v545 = vmul.f32 %v481, 25.4
  %v546 = vmul.f32 %v482, -0.5
  %v547 = vmul.f32 %v483, -0.5
  %v548 = vmul.f32 %v484, -0.5
  %v549 = vmul.f32 %v485, -0.5
  %v550 = vmul.f32 %v486, -0.5
  %v551 = vmul.f32 %v487, -0.5
  %v552 = vmul.f32 %v488, -0.5
  %v553 = vmul.f32 %v489, -0.5
  %v554 = vmul.f32 %v490, -0.5
  %v555 = vmul.f32 %v491, -0.5
  %v556 = vmul.f32 %v492, -0.5
  %v557 = vmul.f32 %v493, -0.5
  %v558 = vmul.f32 %v494, -0.5
  %v559 = vmul.f32 %v495, -0.5
  %v560 = vmul.f32 %v496, -0.5
  %v561 = vmul.f32 %v497, -0.5
  %v562 = vmul.f32 %v498, -0.5
  %v563 = vmul.f32 %v499, -0.5
  %v564 = vmul.f32 %v500, -0.5
  %v565 = vmul.f32 %v501, -0.5
  %v566 = vmul.f32 %v502, -0.5
  %v567 = vmul.f32 %v503, -0.5
  %v568 = vmul.f32 %v504, -0.5
  %v569 = vmul.f32 %v505, -0.5
  %v570 = vmul.f32 %v506, -0.5
  %v571 = vmul.f32 %v507, -0.5
  %v572 = vmul.f32 %v508, -0.5
  %v573 = vmul.f32 %v509, -0.5
  %v574 = vmul.f32 %v510, -0.5
  %v575 = vmul.f32 %v511, -0.5
  %v576 = vmul.f32 %v512, -0.5
  %v577 = vmul.f32 %v513, -0.5
  %v578 = vmul.f32 %v514, -0.5
  %v579 = vmul.f32 %v515, -0.5
  %v580 = vmul.f32 %v516, -0.5
  %v581 = vmul.f32 %v517, -0.5
  %v582 = vmul.f32 %v518, -0.5
  %v583 = vmul.f32 %v519, -0.5
  %v584 = vmul.f32 %v520, -0.5
  %v585 = vmul.f32 %v521, -0.5
  %v586 = vmul.f32 %v522, -0.5
  %v587 = vmul.f32 %v523, -0.5
  %v588 = vmul.f32 %v524, -0.5
  %v589 = vmul.f32 %v525, -0.5
  %v590 = vmul.f32 %v526, -0.5
  %v591 = vmul.f32 %v527, -0.5
  %v592 = vmul.f32 %v528, -0.5
  %v593 = vmul.f32 %v529, -0.5
  %v594 = vmul.f32 %v530, -0.5
  %v595 = vmul.f32 %v531, -0.5
  %v596 = vmul.f32 %v532, -0.5
  %v597 = vmul.f32 %v533, -0.5
  %v598 = vmul.f32 %v534, -0.5
  %v599 = vmul.f32 %v535, -0.5
  %v600 = vmul.f32 %v536, -0.5
  %v601 = vmul.f32 %v537, -0.5
  %v602 = vmul.f32 %v538, -0.5
  %v603 = vmul.f32 %v539, -0.5
  %v604 = vmul.f32 %v540, -0.5
  %v605 = vmul.f32 %v541, -0.5
  %v606 = vmul.f32 %v542, -0.5
  %v607 = vmul.f32 %v543, -0.5
  %v608 = vmul.f32 %v544, -0.5
  %v609 = vmul.f32 %v545, -0.5
  %v610 = vmul.f32 %v546, %v482
  %v611 = vmul.f32 %v547, %v483
  %v612 = vmul.f32 %v548, %v484
  %v613 = vmul.f32 %v549, %v485
  %v614 = vmul.f32 %v550, %v486
  %v615 = vmul.f32 %v551, %v487
  %v616 = vmul.f32 %v552, %v488
  %v617 = vmul.f32 %v553, %v489
  %v618 = vmul.f32 %v554, %v490
  %v619 = vmul.f32 %v555, %v491
  %v620 = vmul.f32 %v556, %v492
  %v621 = vmul.f32 %v557, %v493
  %v622 = vmul.f32 %v558, %v494
  %v623 = vmul.f32 %v559, %v495
  %v624 = vmul.f32 %v560, %v496
  %v625 = vmul.f32 %v561, %v497
  %v626 = vmul.f32 %v562, %v498
  %v627 = vmul.f32 %v563, %v499
  %v628 = vmul.f32 %v564, %v500
  %v629 = vmul.f32 %v565, %v501
  %v630 = vmul.f32 %v566, %v502
  %v631 = vmul.f32 %v567, %v503
  %v632 = vmul.f32 %v568, %v504
  %v633 = vmul.f32 %v569, %v505
  %v634 = vmul.f32 %v570, %v506
  %v635 = vmul.f32 %v571, %v507
  %v636 = vmul.f32 %v572, %v508
  %v637 = vmul.f32 %v573, %v509
  %v638 = vmul.f32 %v574, %v510
  %v639 = vmul.f32 %v575, %v511
  %v640 = vmul.f32 %v576, %v512
  %v641 = vmul.f32 %v577, %v513
  %v642 = vmul.f32 %v578, %v514
  %v643 = vmul.f32 %v579, %v515
  %v644 = vmul.f32 %v580, %v516
  %v645 = vmul.f32 %v581, %v517
  %v646 = vmul.f32 %v582, %v518
  %v647 = vmul.f32 %v583, %v519
  %v648 = vmul.f32 %v584, %v520
  %v649 = vmul.f32 %v585, %v521
  %v650 = vmul.f32 %v586, %v522
  %v651 = vmul.f32 %v587, %v523
  %v652 = vmul.f32 %v588, %v524
  %v653 = vmul.f32 %v589, %v525
  %v654 = vmul.f32 %v590, %v526
  %v655 = vmul.f32 %v591, %v527
  %v656 = vmul.f32 %v592, %v528
  %v657 = vmul.f32 %v593, %v529
  %v658 = vmul.f32 %v594, %v530
  %v659 = vmul.f32 %v595, %v531
  %v660 = vmul.f32 %v596, %v532
  %v661 = vmul.f32 %v597, %v533
  %v662 = vmul.f32 %v598, %v534
  %v663 = vmul.f32 %v599, %v535
  %v664 = vmul.f32 %v600, %v536
  %v665 = vmul.f32 %v601, %v537
  %v666 = vmul.f32 %v602, %v538
  %v667 = vmul.f32 %v603, %v539
  %v668 = vmul.f32 %v604, %v540
  %v669 = vmul.f32 %v605, %v541
  %v670 = vmul.f32 %v606, %v542
  %v671 = vmul.f32 %v607, %v543
  %v672 = vmul.f32 %v608, %v544
  %v673 = vmul.f32 %v609, %v545
  %v674 = vmul.f32 %v610, 1.442695
  %v675 = vpow.pop %v674
  %v676 = vmul.f32 %v611, 1.442695
  %v677 = vpow.pop %v676
  %v678 = vmul.f32 %v612, 1.442695
  %v679 = vpow.pop %v678
  %v680 = vmul.f32 %v613, 1.442695
  %v681 = vpow.pop %v680
  %v682 = vmul.f32 %v614, 1.442695
  %v683 = vpow.pop %v682
  %v684 = vmul.f32 %v615, 1.442695
  %v685 = vpow.pop %v684
  %v686 = vmul.f32 %v616, 1.442695
  %v687 = vpow.pop %v686
  %v688 = vmul.f32 %v617, 1.442695
  %v689 = vpow.pop %v688
  %v690 = vmul.f32 %v618, 1.442695
  %v691 = vpow.pop %v690
  %v692 = vmul.f32 %v619, 1.442695
  %v693 = vpow.pop %v692
  %v694 = vmul.f32 %v620, 1.442695
  %v695 = vpow.pop %v694
  %v696 = vmul.f32 %v621, 1.442695
  %v697 = vpow.pop %v696
  %v698 = vmul.f32 %v622, 1.442695
  %v699 = vpow.pop %v698
  %v700 = vmul.f32 %v623, 1.442695
  %v701 = vpow.pop %v700
  %v702 = vmul.f32 %v624, 1.442695
  %v703 = vpow.pop %v702
  %v704 = vmul.f32 %v625, 1.442695
  %v705 = vpow.pop %v704
  %v706 = vmul.f32 %v626, 1.442695
  %v707 = vpow.pop %v706
  %v708 = vmul.f32 %v627, 1.442695
  %v709 = vpow.pop %v708
  %v710 = vmul.f32 %v628, 1.442695
  %v711 = vpow.pop %v710
  %v712 = vmul.f32 %v629, 1.442695
  %v713 = vpow.pop %v712
  %v714 = vmul.f32 %v630, 1.442695
  %v715 = vpow.pop %v714
  %v716 = vmul.f32 %v631, 1.442695
  %v717 = vpow.pop %v716
  %v718 = vmul.f32 %v632, 1.442695
  %v719 = vpow.pop %v718
  %v720 = vmul.f32 %v633, 1.442695
  %v721 = vpow.pop %v720
  %v722 = vmul.f32 %v634, 1.442695
  %v723 = vpow.pop %v722
  %v724 = vmul.f32 %v635, 1.442695
  %v725 = vpow.pop %v724
  %v726 = vmul.f32 %v636, 1.442695
  %v727 = vpow.pop %v726
  %v728 = vmul.f32 %v637, 1.442695
  %v729 = vpow.pop %v728
  %v730 = vmul.f32 %v638, 1.442695
  %v731 = vpow.pop %v730
  %v732 = vmul.f32 %v639, 1.442695
  %v733 = vpow.pop %v732
  %v734 = vmul.f32 %v640, 1.442695
  %v735 = vpow.pop %v734
  %v736 = vmul.f32 %v641, 1.442695
  %v737 = vpow.pop %v736
  %v738 = vmul.f32 %v642, 1.442695
  %v739 = vpow.pop %v738
  %v740 = vmul.f32 %v643, 1.442695
  %v741 = vpow.pop %v740
  %v742 = vmul.f32 %v644, 1.442695
  %v743 = vpow.pop %v742
  %v744 = vmul.f32 %v645, 1.442695
  %v745 = vpow.pop %v744
  %v746 = vmul.f32 %v646, 1.442695
  %v747 = vpow.pop %v746
  %v748 = vmul.f32 %v647, 1.442695
  %v749 = vpow.pop %v748
  %v750 = vmul.f32 %v648, 1.442695
  %v751 = vpow.pop %v750
  %v752 = vmul.f32 %v649, 1.442695
  %v753 = vpow.pop %v752
  %v754 = vmul.f32 %v650, 1.442695
  %v755 = vpow.pop %v754
  %v756 = vmul.f32 %v651, 1.442695
  %v757 = vpow.pop %v756
  %v758 = vmul.f32 %v652, 1.442695
  %v759 = vpow.pop %v758
  %v760 = vmul.f32 %v653, 1.442695
  %v761 = vpow.pop %v760
  %v762 = vmul.f32 %v654, 1.442695
  %v763 = vpow.pop %v762
  %v764 = vmul.f32 %v655, 1.442695
  %v765 = vpow.pop %v764
  %v766 = vmul.f32 %v656, 1.442695
  %v767 = vpow.pop %v766
  %v768 = vmul.f32 %v657, 1.442695
  %v769 = vpow.pop %v768
  %v770 = vmul.f32 %v658, 1.442695
  %v771 = vpow.pop %v770
  %v772 = vmul.f32 %v659, 1.442695
  %v773 = vpow.pop %v772
  %v774 = vmul.f32 %v660, 1.442695
  %v775 = vpow.pop %v774
  %v776 = vmul.f32 %v661, 1.442695
  %v777 = vpow.pop %v776
  %v778 = vmul.f32 %v662, 1.442695
  %v779 = vpow.pop %v778
  %v780 = vmul.f32 %v663, 1.442695
  %v781 = vpow.pop %v780
  %v782 = vmul.f32 %v664, 1.442695
  %v783 = vpow.pop %v782
  %v784 = vmul.f32 %v665, 1.442695
  %v785 = vpow.pop %v784
  %v786 = vmul.f32 %v666, 1.442695
  %v787 = vpow.pop %v786
  %v788 = vmul.f32 %v667, 1.442695
  %v789 = vpow.pop %v788
  %v790 = vmul.f32 %v668, 1.442695
  %v791 = vpow.pop %v790
  %v792 = vmul.f32 %v669, 1.442695
  %v793 = vpow.pop %v792
  %v794 = vmul.f32 %v670, 1.442695
  %v795 = vpow.pop %v794
  %v796 = vmul.f32 %v671, 1.442695
  %v797 = vpow.pop %v796
  %v798 = vmul.f32 %v672, 1.442695
  %v799 = vpow.pop %v798
  %v800 = vmul.f32 %v673, 1.442695
  %v801 = vpow.pop %v800
  %v802 = vmul.f32 %v675, 10.133134
  %v803 = vmul.f32 %v677, 10.133134
  %v804 = vmul.f32 %v679, 10.133134
  %v805 = vmul.f32 %v681, 10.133134
  %v806 = vmul.f32 %v683, 10.133134
  %v807 = vmul.f32 %v685, 10.133134
  %v808 = vmul.f32 %v687, 10.133134
  %v809 = vmul.f32 %v689, 10.133134
  %v810 = vmul.f32 %v691, 10.133134
  %v811 = vmul.f32 %v693, 10.133134
  %v812 = vmul.f32 %v695, 10.133134
  %v813 = vmul.f32 %v697, 10.133134
  %v814 = vmul.f32 %v699, 10.133134
  %v815 = vmul.f32 %v701, 10.133134
  %v816 = vmul.f32 %v703, 10.133134
  %v817 = vmul.f32 %v705, 10.133134
  %v818 = vmul.f32 %v707, 10.133134
  %v819 = vmul.f32 %v709, 10.133134
  %v820 = vmul.f32 %v711, 10.133134
  %v821 = vmul.f32 %v713, 10.133134
  %v822 = vmul.f32 %v715, 10.133134
  %v823 = vmul.f32 %v717, 10.133134
  %v824 = vmul.f32 %v719, 10.133134
  %v825 = vmul.f32 %v721, 10.133134
  %v826 = vmul.f32 %v723, 10.133134
  %v827 = vmul.f32 %v725, 10.133134
  %v828 = vmul.f32 %v727, 10.133134
  %v829 = vmul.f32 %v729, 10.133134
  %v830 = vmul.f32 %v731, 10.133134
  %v831 = vmul.f32 %v733, 10.133134
  %v832 = vmul.f32 %v735, 10.133134
  %v833 = vmul.f32 %v737, 10.133134
  %v834 = vmul.f32 %v739, 10.133134
  %v835 = vmul.f32 %v741, 10.133134
  %v836 = vmul.f32 %v743, 10.133134
  %v837 = vmul.f32 %v745, 10.133134
  %v838 = vmul.f32 %v747, 10.133134
  %v839 = vmul.f32 %v749, 10.133134
  %v840 = vmul.f32 %v751, 10.133134
  %v841 = vmul.f32 %v753, 10.133134
  %v842 = vmul.f32 %v755, 10.133134
  %v843 = vmul.f32 %v757, 10.133134
  %v844 = vmul.f32 %v759, 10.133134
  %v845 = vmul.f32 %v761, 10.133134
  %v846 = vmul.f32 %v763, 10.133134
  %v847 = vmul.f32 %v765, 10.133134
  %v848 = vmul.f32 %v767, 10.133134
  %v849 = vmul.f32 %v769, 10.133134
  %v850 = vmul.f32 %v771, 10.133134
  %v851 = vmul.f32 %v773, 10.133134
  %v852 = vmul.f32 %v775, 10.133134
  %v853 = vmul.f32 %v777, 10.133134
  %v854 = vmul.f32 %v779, 10.133134
  %v855 = vmul.f32 %v781, 10.133134
  %v856 = vmul.f32 %v783, 10.133134
  %v857 = vmul.f32 %v785, 10.133134
  %v858 = vmul.f32 %v787, 10.133134
  %v859 = vmul.f32 %v789, 10.133134
  %v860 = vmul.f32 %v791, 10.133134
  %v861 = vmul.f32 %v793, 10.133134
  %v862 = vmul.f32 %v795, 10.133134
  %v863 = vmul.f32 %v797, 10.133134
  %v864 = vmul.f32 %v799, 10.133134
  %v865 = vmul.f32 %v801, 10.133134
  %v866 = vpack.c.bf16 %v803, %v802
  %v867 = vpack.c.bf16 %v805, %v804
  %v868 = vpack.c.bf16 %v807, %v806
  %v869 = vpack.c.bf16 %v809, %v808
  %v870 = vpack.c.bf16 %v811, %v810
  %v871 = vpack.c.bf16 %v813, %v812
  %v872 = vpack.c.bf16 %v815, %v814
  %v873 = vpack.c.bf16 %v817, %v816
  %v874 = vpack.c.bf16 %v819, %v818
  %v875 = vpack.c.bf16 %v821, %v820
  %v876 = vpack.c.bf16 %v823, %v822
  %v877 = vpack.c.bf16 %v825, %v824
  %v878 = vpack.c.bf16 %v827, %v826
  %v879 = vpack.c.bf16 %v829, %v828
  %v880 = vpack.c.bf16 %v831, %v830
  %v881 = vpack.c.bf16 %v833, %v832
  %v882 = vpack.c.bf16 %v835, %v834
  %v883 = vpack.c.bf16 %v837, %v836
  %v884 = vpack.c.bf16 %v839, %v838
  %v885 = vpack.c.bf16 %v841, %v840
  %v886 = vpack.c.bf16 %v843, %v842
  %v887 = vpack.c.bf16 %v845, %v844
  %v888 = vpack.c.bf16 %v847, %v846
  %v889 = vpack.c.bf16 %v849, %v848
  %v890 = vpack.c.bf16 %v851, %v850
  %v891 = vpack.c.bf16 %v853, %v852
  %v892 = vpack.c.bf16 %v855, %v854
  %v893 = vpack.c.bf16 %v857, %v856
  %v894 = vpack.c.bf16 %v859, %v858
  %v895 = vpack.c.bf16 %v861, %v860
  %v896 = vpack.c.bf16 %v863, %v862
  %v897 = vpack.c.bf16 %v865, %v864
  %v898 = vld [vmem:[%s3] sm:$0xf]
  %v899 = vld [vmem:[%s3 + $0x4] sm:$0xf]
  %v900 = vld [vmem:[%s3 + $0x8] sm:$0xf]
  %v901 = vld [vmem:[%s3 + $0xc] sm:$0xf]
  %v902 = vld [vmem:[%s3 + $0x10] sm:$0xf]
  %v903 = vld [vmem:[%s3 + $0x14] sm:$0xf]
  %v904 = vld [vmem:[%s3 + $0x18] sm:$0xf]
  %v905 = vld [vmem:[%s3 + $0x1c] sm:$0xf]
  %v906 = vld [vmem:[%s3 + $0x20] sm:$0xf]
  %v907 = vld [vmem:[%s3 + $0x24] sm:$0xf]
  %v908 = vld [vmem:[%s3 + $0x28] sm:$0xf]
  %v909 = vld [vmem:[%s3 + $0x2c] sm:$0xf]
  %v910 = vld [vmem:[%s3 + $0x30] sm:$0xf]
  %v911 = vld [vmem:[%s3 + $0x34] sm:$0xf]
  %v912 = vld [vmem:[%s3 + $0x38] sm:$0xf]
  %v913 = vld [vmem:[%s3 + $0x3c] sm:$0xf]
  %v914 = vld [vmem:[%s4] sm:$0x1]
  %v916 = vlaneseq
  %v917 = vshrl.u32 %v916, 7
  %v918 = vsub.s32 0, %v917
  %v919 = vrot.slane %v914, %v918
  %v937 = vunpack.c.l.b16 %v898
  %v938 = vunpack.c.l.b16 %v899
  %v939 = vunpack.c.l.b16 %v900
  %v940 = vunpack.c.l.b16 %v901
  %v941 = vunpack.c.l.b16 %v902
  %v942 = vunpack.c.l.b16 %v903
  %v943 = vunpack.c.l.b16 %v904
  %v944 = vunpack.c.l.b16 %v905
  %v945 = vunpack.c.l.b16 %v906
  %v946 = vunpack.c.l.b16 %v907
  %v947 = vunpack.c.l.b16 %v908
  %v948 = vunpack.c.l.b16 %v909
  %v949 = vunpack.c.l.b16 %v910
  %v950 = vunpack.c.l.b16 %v911
  %v951 = vunpack.c.l.b16 %v912
  %v952 = vunpack.c.l.b16 %v913
  %v953 = vpack.c.b16 %v938, %v937
  %v954 = vpack.c.b16 %v940, %v939
  %v955 = vpack.c.b16 %v942, %v941
  %v956 = vpack.c.b16 %v944, %v943
  %v957 = vpack.c.b16 %v946, %v945
  %v958 = vpack.c.b16 %v948, %v947
  %v959 = vpack.c.b16 %v950, %v949
  %v960 = vpack.c.b16 %v952, %v951
  %969 = vmatprep.subr.bf16.mxu0 0
  %970 = vmatpush1.bf16.msra.mxu0 %v953
  %971 = vmatprep.subr.bf16.mxu0 0
  %972 = vmatpush1.bf16.msra.mxu0 %v954
  %973 = vmatprep.subr.bf16.mxu0 0
  %974 = vmatpush1.bf16.msra.mxu0 %v955
  %975 = vmatprep.subr.bf16.mxu0 0
  %976 = vmatpush1.bf16.msra.mxu0 %v956
  %977 = vmatprep.subr.bf16.mxu0 0
  %978 = vmatpush1.bf16.msra.mxu0 %v957
  %979 = vmatprep.subr.bf16.mxu0 0
  %980 = vmatpush1.bf16.msra.mxu0 %v958
  %981 = vmatprep.subr.bf16.mxu0 0
  %982 = vmatpush1.bf16.msra.mxu0 %v959
  %983 = vmatprep.subr.bf16.mxu0 0
  %984 = vmatpush1.bf16.msra.mxu0 %v960
  %985 = vmatprep.subr.bf16.mxu0 0
  %986 = vmatpush1.bf16.msra.mxu0 0
  %987 = vmatprep.subr.bf16.mxu0 0
  %988 = vmatpush1.bf16.msra.mxu0 0
  %989 = vmatprep.subr.bf16.mxu0 0
  %990 = vmatpush1.bf16.msra.mxu0 0
  %991 = vmatprep.subr.bf16.mxu0 0
  %992 = vmatpush1.bf16.msra.mxu0 0
  %993 = vmatprep.subr.bf16.mxu0 0
  %994 = vmatpush1.bf16.msra.mxu0 0
  %995 = vmatprep.subr.bf16.mxu0 0
  %996 = vmatpush1.bf16.msra.mxu0 0
  %997 = vmatprep.subr.bf16.mxu0 0
  %998 = vmatpush1.bf16.msra.mxu0 0
  %999 = vmatprep.subr.bf16.mxu0 0
  %1000 = vmatpush1.bf16.msra.mxu0 0
  %1001 = vmatprep.mubr.bf16.mxu0 0
  %1002 = vmatmul.mubr.bf16.gmra.mrb[0].mxu0 %v866
  %v1003 = vpop.f32.mrb[0].mxu0
  %v1004 = vadd.f32 %v919, %v1003
  %v1005 = vpop.f32.mrb[0].mxu0
  %v1006 = vpop.f32.mrb[0].mxu0
  %v1007 = vadd.f32 %v919, %v1006
  %v1008 = vpop.f32.mrb[0].mxu0
  %1009 = vmatprep.mubr.bf16.mxu0 0
  %1010 = vmatmul.mubr.bf16.gmra.mrb[0].mxu0 %v867
  %v1011 = vpop.f32.mrb[0].mxu0
  %v1012 = vadd.f32 %v919, %v1011
  %v1013 = vpop.f32.mrb[0].mxu0
  %v1014 = vpop.f32.mrb[0].mxu0
  %v1015 = vadd.f32 %v919, %v1014
  %v1016 = vpop.f32.mrb[0].mxu0
  %1017 = vmatprep.mubr.bf16.mxu0 0
  %1018 = vmatmul.mubr.bf16.gmra.mrb[0].mxu0 %v868
  %v1019 = vpop.f32.mrb[0].mxu0
  %v1020 = vadd.f32 %v919, %v1019
  %v1021 = vpop.f32.mrb[0].mxu0
  %v1022 = vpop.f32.mrb[0].mxu0
  %v1023 = vadd.f32 %v919, %v1022
  %v1024 = vpop.f32.mrb[0].mxu0
  %1025 = vmatprep.mubr.bf16.mxu0 0
  %1026 = vmatmul.mubr.bf16.gmra.mrb[0].mxu0 %v869
  %v1027 = vpop.f32.mrb[0].mxu0
  %v1028 = vadd.f32 %v919, %v1027
  %v1029 = vpop.f32.mrb[0].mxu0
  %v1030 = vpop.f32.mrb[0].mxu0
  %v1031 = vadd.f32 %v919, %v1030
  %v1032 = vpop.f32.mrb[0].mxu0
  %1033 = vmatprep.mubr.bf16.mxu0 0
  %1034 = vmatmul.mubr.bf16.gmra.mrb[0].mxu0 %v870
  %v1035 = vpop.f32.mrb[0].mxu0
  %v1036 = vadd.f32 %v919, %v1035
  %v1037 = vpop.f32.mrb[0].mxu0
  %v1038 = vpop.f32.mrb[0].mxu0
  %v1039 = vadd.f32 %v919, %v1038
  %v1040 = vpop.f32.mrb[0].mxu0
  %1041 = vmatprep.mubr.bf16.mxu0 0
  %1042 = vmatmul.mubr.bf16.gmra.mrb[0].mxu0 %v871
  %v1043 = vpop.f32.mrb[0].mxu0
  %v1044 = vadd.f32 %v919, %v1043
  %v1045 = vpop.f32.mrb[0].mxu0
  %v1046 = vpop.f32.mrb[0].mxu0
  %v1047 = vadd.f32 %v919, %v1046
  %v1048 = vpop.f32.mrb[0].mxu0
  %1049 = vmatprep.mubr.bf16.mxu0 0
  %1050 = vmatmul.mubr.bf16.gmra.mrb[0].mxu0 %v872
  %v1051 = vpop.f32.mrb[0].mxu0
  %v1052 = vadd.f32 %v919, %v1051
  %v1053 = vpop.f32.mrb[0].mxu0
  %v1054 = vpop.f32.mrb[0].mxu0
  %v1055 = vadd.f32 %v919, %v1054
  %v1056 = vpop.f32.mrb[0].mxu0
  %1057 = vmatprep.mubr.bf16.mxu0 0
  %1058 = vmatmul.mubr.bf16.gmra.mrb[0].mxu0 %v873
  %v1059 = vpop.f32.mrb[0].mxu0
  %v1060 = vadd.f32 %v919, %v1059
  %v1061 = vpop.f32.mrb[0].mxu0
  %v1062 = vpop.f32.mrb[0].mxu0
  %v1063 = vadd.f32 %v919, %v1062
  %v1064 = vpop.f32.mrb[0].mxu0
  %1065 = vmatprep.mubr.bf16.mxu0 0
  %1066 = vmatmul.mubr.bf16.gmra.mrb[0].mxu0 %v874
  %v1067 = vpop.f32.mrb[0].mxu0
  %v1068 = vadd.f32 %v919, %v1067
  %v1069 = vpop.f32.mrb[0].mxu0
  %v1070 = vpop.f32.mrb[0].mxu0
  %v1071 = vadd.f32 %v919, %v1070
  %v1072 = vpop.f32.mrb[0].mxu0
  %1073 = vmatprep.mubr.bf16.mxu0 0
  %1074 = vmatmul.mubr.bf16.gmra.mrb[0].mxu0 %v875
  %v1075 = vpop.f32.mrb[0].mxu0
  %v1076 = vadd.f32 %v919, %v1075
  %v1077 = vpop.f32.mrb[0].mxu0
  %v1078 = vpop.f32.mrb[0].mxu0
  %v1079 = vadd.f32 %v919, %v1078
  %v1080 = vpop.f32.mrb[0].mxu0
  %1081 = vmatprep.mubr.bf16.mxu0 0
  %1082 = vmatmul.mubr.bf16.gmra.mrb[0].mxu0 %v876
  %v1083 = vpop.f32.mrb[0].mxu0
  %v1084 = vadd.f32 %v919, %v1083
  %v1085 = vpop.f32.mrb[0].mxu0
  %v1086 = vpop.f32.mrb[0].mxu0
  %v1087 = vadd.f32 %v919, %v1086
  %v1088 = vpop.f32.mrb[0].mxu0
  %1089 = vmatprep.mubr.bf16.mxu0 0
  %1090 = vmatmul.mubr.bf16.gmra.mrb[0].mxu0 %v877
  %v1091 = vpop.f32.mrb[0].mxu0
  %v1092 = vadd.f32 %v919, %v1091
  %v1093 = vpop.f32.mrb[0].mxu0
  %v1094 = vpop.f32.mrb[0].mxu0
  %v1095 = vadd.f32 %v919, %v1094
  %v1096 = vpop.f32.mrb[0].mxu0
  %1097 = vmatprep.mubr.bf16.mxu0 0
  %1098 = vmatmul.mubr.bf16.gmra.mrb[0].mxu0 %v878
  %v1099 = vpop.f32.mrb[0].mxu0
  %v1100 = vadd.f32 %v919, %v1099
  %v1101 = vpop.f32.mrb[0].mxu0
  %v1102 = vpop.f32.mrb[0].mxu0
  %v1103 = vadd.f32 %v919, %v1102
  %v1104 = vpop.f32.mrb[0].mxu0
  %1105 = vmatprep.mubr.bf16.mxu0 0
  %1106 = vmatmul.mubr.bf16.gmra.mrb[0].mxu0 %v879
  %v1107 = vpop.f32.mrb[0].mxu0
  %v1108 = vadd.f32 %v919, %v1107
  %v1109 = vpop.f32.mrb[0].mxu0
  %v1110 = vpop.f32.mrb[0].mxu0
  %v1111 = vadd.f32 %v919, %v1110
  %v1112 = vpop.f32.mrb[0].mxu0
  %1113 = vmatprep.mubr.bf16.mxu0 0
  %1114 = vmatmul.mubr.bf16.gmra.mrb[0].mxu0 %v880
  %v1115 = vpop.f32.mrb[0].mxu0
  %v1116 = vadd.f32 %v919, %v1115
  %v1117 = vpop.f32.mrb[0].mxu0
  %v1118 = vpop.f32.mrb[0].mxu0
  %v1119 = vadd.f32 %v919, %v1118
  %v1120 = vpop.f32.mrb[0].mxu0
  %1121 = vmatprep.mubr.bf16.mxu0 0
  %1122 = vmatmul.mubr.bf16.gmra.mrb[0].mxu0 %v881
  %v1123 = vpop.f32.mrb[0].mxu0
  %v1124 = vadd.f32 %v919, %v1123
  %v1125 = vpop.f32.mrb[0].mxu0
  %v1126 = vpop.f32.mrb[0].mxu0
  %v1127 = vadd.f32 %v919, %v1126
  %v1128 = vpop.f32.mrb[0].mxu0
  %1129 = vmatprep.mubr.bf16.mxu0 0
  %1130 = vmatmul.mubr.bf16.gmra.mrb[0].mxu0 %v882
  %v1131 = vpop.f32.mrb[0].mxu0
  %v1132 = vadd.f32 %v919, %v1131
  %v1133 = vpop.f32.mrb[0].mxu0
  %v1134 = vpop.f32.mrb[0].mxu0
  %v1135 = vadd.f32 %v919, %v1134
  %v1136 = vpop.f32.mrb[0].mxu0
  %1137 = vmatprep.mubr.bf16.mxu0 0
  %1138 = vmatmul.mubr.bf16.gmra.mrb[0].mxu0 %v883
  %v1139 = vpop.f32.mrb[0].mxu0
  %v1140 = vadd.f32 %v919, %v1139
  %v1141 = vpop.f32.mrb[0].mxu0
  %v1142 = vpop.f32.mrb[0].mxu0
  %v1143 = vadd.f32 %v919, %v1142
  %v1144 = vpop.f32.mrb[0].mxu0
  %1145 = vmatprep.mubr.bf16.mxu0 0
  %1146 = vmatmul.mubr.bf16.gmra.mrb[0].mxu0 %v884
  %v1147 = vpop.f32.mrb[0].mxu0
  %v1148 = vadd.f32 %v919, %v1147
  %v1149 = vpop.f32.mrb[0].mxu0
  %v1150 = vpop.f32.mrb[0].mxu0
  %v1151 = vadd.f32 %v919, %v1150
  %v1152 = vpop.f32.mrb[0].mxu0
  %1153 = vmatprep.mubr.bf16.mxu0 0
  %1154 = vmatmul.mubr.bf16.gmra.mrb[0].mxu0 %v885
  %v1155 = vpop.f32.mrb[0].mxu0
  %v1156 = vadd.f32 %v919, %v1155
  %v1157 = vpop.f32.mrb[0].mxu0
  %v1158 = vpop.f32.mrb[0].mxu0
  %v1159 = vadd.f32 %v919, %v1158
  %v1160 = vpop.f32.mrb[0].mxu0
  %1161 = vmatprep.mubr.bf16.mxu0 0
  %1162 = vmatmul.mubr.bf16.gmra.mrb[0].mxu0 %v886
  %v1163 = vpop.f32.mrb[0].mxu0
  %v1164 = vadd.f32 %v919, %v1163
  %v1165 = vpop.f32.mrb[0].mxu0
  %v1166 = vpop.f32.mrb[0].mxu0
  %v1167 = vadd.f32 %v919, %v1166
  %v1168 = vpop.f32.mrb[0].mxu0
  %1169 = vmatprep.mubr.bf16.mxu0 0
  %1170 = vmatmul.mubr.bf16.gmra.mrb[0].mxu0 %v887
  %v1171 = vpop.f32.mrb[0].mxu0
  %v1172 = vadd.f32 %v919, %v1171
  %v1173 = vpop.f32.mrb[0].mxu0
  %v1174 = vpop.f32.mrb[0].mxu0
  %v1175 = vadd.f32 %v919, %v1174
  %v1176 = vpop.f32.mrb[0].mxu0
  %1177 = vmatprep.mubr.bf16.mxu0 0
  %1178 = vmatmul.mubr.bf16.gmra.mrb[0].mxu0 %v888
  %v1179 = vpop.f32.mrb[0].mxu0
  %v1180 = vadd.f32 %v919, %v1179
  %v1181 = vpop.f32.mrb[0].mxu0
  %v1182 = vpop.f32.mrb[0].mxu0
  %v1183 = vadd.f32 %v919, %v1182
  %v1184 = vpop.f32.mrb[0].mxu0
  %1185 = vmatprep.mubr.bf16.mxu0 0
  %1186 = vmatmul.mubr.bf16.gmra.mrb[0].mxu0 %v889
  %v1187 = vpop.f32.mrb[0].mxu0
  %v1188 = vadd.f32 %v919, %v1187
  %v1189 = vpop.f32.mrb[0].mxu0
  %v1190 = vpop.f32.mrb[0].mxu0
  %v1191 = vadd.f32 %v919, %v1190
  %v1192 = vpop.f32.mrb[0].mxu0
  %1193 = vmatprep.mubr.bf16.mxu0 0
  %1194 = vmatmul.mubr.bf16.gmra.mrb[0].mxu0 %v890
  %v1195 = vpop.f32.mrb[0].mxu0
  %v1196 = vadd.f32 %v919, %v1195
  %v1197 = vpop.f32.mrb[0].mxu0
  %v1198 = vpop.f32.mrb[0].mxu0
  %v1199 = vadd.f32 %v919, %v1198
  %v1200 = vpop.f32.mrb[0].mxu0
  %1201 = vmatprep.mubr.bf16.mxu0 0
  %1202 = vmatmul.mubr.bf16.gmra.mrb[0].mxu0 %v891
  %v1203 = vpop.f32.mrb[0].mxu0
  %v1204 = vadd.f32 %v919, %v1203
  %v1205 = vpop.f32.mrb[0].mxu0
  %v1206 = vpop.f32.mrb[0].mxu0
  %v1207 = vadd.f32 %v919, %v1206
  %v1208 = vpop.f32.mrb[0].mxu0
  %1209 = vmatprep.mubr.bf16.mxu0 0
  %1210 = vmatmul.mubr.bf16.gmra.mrb[0].mxu0 %v892
  %v1211 = vpop.f32.mrb[0].mxu0
  %v1212 = vadd.f32 %v919, %v1211
  %v1213 = vpop.f32.mrb[0].mxu0
  %v1214 = vpop.f32.mrb[0].mxu0
  %v1215 = vadd.f32 %v919, %v1214
  %v1216 = vpop.f32.mrb[0].mxu0
  %1217 = vmatprep.mubr.bf16.mxu0 0
  %1218 = vmatmul.mubr.bf16.gmra.mrb[0].mxu0 %v893
  %v1219 = vpop.f32.mrb[0].mxu0
  %v1220 = vadd.f32 %v919, %v1219
  %v1221 = vpop.f32.mrb[0].mxu0
  %v1222 = vpop.f32.mrb[0].mxu0
  %v1223 = vadd.f32 %v919, %v1222
  %v1224 = vpop.f32.mrb[0].mxu0
  %1225 = vmatprep.mubr.bf16.mxu0 0
  %1226 = vmatmul.mubr.bf16.gmra.mrb[0].mxu0 %v894
  %v1227 = vpop.f32.mrb[0].mxu0
  %v1228 = vadd.f32 %v919, %v1227
  %v1229 = vpop.f32.mrb[0].mxu0
  %v1230 = vpop.f32.mrb[0].mxu0
  %v1231 = vadd.f32 %v919, %v1230
  %v1232 = vpop.f32.mrb[0].mxu0
  %1233 = vmatprep.mubr.bf16.mxu0 0
  %1234 = vmatmul.mubr.bf16.gmra.mrb[0].mxu0 %v895
  %v1235 = vpop.f32.mrb[0].mxu0
  %v1236 = vadd.f32 %v919, %v1235
  %v1237 = vpop.f32.mrb[0].mxu0
  %v1238 = vpop.f32.mrb[0].mxu0
  %v1239 = vadd.f32 %v919, %v1238
  %v1240 = vpop.f32.mrb[0].mxu0
  %1241 = vmatprep.mubr.bf16.mxu0 0
  %1242 = vmatmul.mubr.bf16.gmra.mrb[0].mxu0 %v896
  %v1243 = vpop.f32.mrb[0].mxu0
  %v1244 = vadd.f32 %v919, %v1243
  %v1245 = vpop.f32.mrb[0].mxu0
  %v1246 = vpop.f32.mrb[0].mxu0
  %v1247 = vadd.f32 %v919, %v1246
  %v1248 = vpop.f32.mrb[0].mxu0
  %1249 = vmatprep.mubr.bf16.mxu0 0
  %1250 = vmatmul.mubr.bf16.gmra.mrb[0].mxu0 %v897
  %v1251 = vpop.f32.mrb[0].mxu0
  %v1252 = vadd.f32 %v919, %v1251
  %v1253 = vpop.f32.mrb[0].mxu0
  %v1254 = vpop.f32.mrb[0].mxu0
  %v1255 = vadd.f32 %v919, %v1254
  %v1256 = vpop.f32.mrb[0].mxu0
  %1257 = vdwg.mxu0
  %v1258 = vmul.f32 %v1004, %v1004
  %v1259 = vmul.f32 %v1007, %v1007
  %v1260 = vmul.f32 %v1012, %v1012
  %v1261 = vmul.f32 %v1015, %v1015
  %v1262 = vmul.f32 %v1020, %v1020
  %v1263 = vmul.f32 %v1023, %v1023
  %v1264 = vmul.f32 %v1028, %v1028
  %v1265 = vmul.f32 %v1031, %v1031
  %v1266 = vmul.f32 %v1036, %v1036
  %v1267 = vmul.f32 %v1039, %v1039
  %v1268 = vmul.f32 %v1044, %v1044
  %v1269 = vmul.f32 %v1047, %v1047
  %v1270 = vmul.f32 %v1052, %v1052
  %v1271 = vmul.f32 %v1055, %v1055
  %v1272 = vmul.f32 %v1060, %v1060
  %v1273 = vmul.f32 %v1063, %v1063
  %v1274 = vmul.f32 %v1068, %v1068
  %v1275 = vmul.f32 %v1071, %v1071
  %v1276 = vmul.f32 %v1076, %v1076
  %v1277 = vmul.f32 %v1079, %v1079
  %v1278 = vmul.f32 %v1084, %v1084
  %v1279 = vmul.f32 %v1087, %v1087
  %v1280 = vmul.f32 %v1092, %v1092
  %v1281 = vmul.f32 %v1095, %v1095
  %v1282 = vmul.f32 %v1100, %v1100
  %v1283 = vmul.f32 %v1103, %v1103
  %v1284 = vmul.f32 %v1108, %v1108
  %v1285 = vmul.f32 %v1111, %v1111
  %v1286 = vmul.f32 %v1116, %v1116
  %v1287 = vmul.f32 %v1119, %v1119
  %v1288 = vmul.f32 %v1124, %v1124
  %v1289 = vmul.f32 %v1127, %v1127
  %v1290 = vmul.f32 %v1132, %v1132
  %v1291 = vmul.f32 %v1135, %v1135
  %v1292 = vmul.f32 %v1140, %v1140
  %v1293 = vmul.f32 %v1143, %v1143
  %v1294 = vmul.f32 %v1148, %v1148
  %v1295 = vmul.f32 %v1151, %v1151
  %v1296 = vmul.f32 %v1156, %v1156
  %v1297 = vmul.f32 %v1159, %v1159
  %v1298 = vmul.f32 %v1164, %v1164
  %v1299 = vmul.f32 %v1167, %v1167
  %v1300 = vmul.f32 %v1172, %v1172
  %v1301 = vmul.f32 %v1175, %v1175
  %v1302 = vmul.f32 %v1180, %v1180
  %v1303 = vmul.f32 %v1183, %v1183
  %v1304 = vmul.f32 %v1188, %v1188
  %v1305 = vmul.f32 %v1191, %v1191
  %v1306 = vmul.f32 %v1196, %v1196
  %v1307 = vmul.f32 %v1199, %v1199
  %v1308 = vmul.f32 %v1204, %v1204
  %v1309 = vmul.f32 %v1207, %v1207
  %v1310 = vmul.f32 %v1212, %v1212
  %v1311 = vmul.f32 %v1215, %v1215
  %v1312 = vmul.f32 %v1220, %v1220
  %v1313 = vmul.f32 %v1223, %v1223
  %v1314 = vmul.f32 %v1228, %v1228
  %v1315 = vmul.f32 %v1231, %v1231
  %v1316 = vmul.f32 %v1236, %v1236
  %v1317 = vmul.f32 %v1239, %v1239
  %v1318 = vmul.f32 %v1244, %v1244
  %v1319 = vmul.f32 %v1247, %v1247
  %v1320 = vmul.f32 %v1252, %v1252
  %v1321 = vmul.f32 %v1255, %v1255
  %v1322 = vmul.f32 %v1004, %v1258
  %v1323 = vmul.f32 %v1007, %v1259
  %v1324 = vmul.f32 %v1012, %v1260
  %v1325 = vmul.f32 %v1015, %v1261
  %v1326 = vmul.f32 %v1020, %v1262
  %v1327 = vmul.f32 %v1023, %v1263
  %v1328 = vmul.f32 %v1028, %v1264
  %v1329 = vmul.f32 %v1031, %v1265
  %v1330 = vmul.f32 %v1036, %v1266
  %v1331 = vmul.f32 %v1039, %v1267
  %v1332 = vmul.f32 %v1044, %v1268
  %v1333 = vmul.f32 %v1047, %v1269
  %v1334 = vmul.f32 %v1052, %v1270
  %v1335 = vmul.f32 %v1055, %v1271
  %v1336 = vmul.f32 %v1060, %v1272
  %v1337 = vmul.f32 %v1063, %v1273
  %v1338 = vmul.f32 %v1068, %v1274
  %v1339 = vmul.f32 %v1071, %v1275
  %v1340 = vmul.f32 %v1076, %v1276
  %v1341 = vmul.f32 %v1079, %v1277
  %v1342 = vmul.f32 %v1084, %v1278
  %v1343 = vmul.f32 %v1087, %v1279
  %v1344 = vmul.f32 %v1092, %v1280
  %v1345 = vmul.f32 %v1095, %v1281
  %v1346 = vmul.f32 %v1100, %v1282
  %v1347 = vmul.f32 %v1103, %v1283
  %v1348 = vmul.f32 %v1108, %v1284
  %v1349 = vmul.f32 %v1111, %v1285
  %v1350 = vmul.f32 %v1116, %v1286
  %v1351 = vmul.f32 %v1119, %v1287
  %v1352 = vmul.f32 %v1124, %v1288
  %v1353 = vmul.f32 %v1127, %v1289
  %v1354 = vmul.f32 %v1132, %v1290
  %v1355 = vmul.f32 %v1135, %v1291
  %v1356 = vmul.f32 %v1140, %v1292
  %v1357 = vmul.f32 %v1143, %v1293
  %v1358 = vmul.f32 %v1148, %v1294
  %v1359 = vmul.f32 %v1151, %v1295
  %v1360 = vmul.f32 %v1156, %v1296
  %v1361 = vmul.f32 %v1159, %v1297
  %v1362 = vmul.f32 %v1164, %v1298
  %v1363 = vmul.f32 %v1167, %v1299
  %v1364 = vmul.f32 %v1172, %v1300
  %v1365 = vmul.f32 %v1175, %v1301
  %v1366 = vmul.f32 %v1180, %v1302
  %v1367 = vmul.f32 %v1183, %v1303
  %v1368 = vmul.f32 %v1188, %v1304
  %v1369 = vmul.f32 %v1191, %v1305
  %v1370 = vmul.f32 %v1196, %v1306
  %v1371 = vmul.f32 %v1199, %v1307
  %v1372 = vmul.f32 %v1204, %v1308
  %v1373 = vmul.f32 %v1207, %v1309
  %v1374 = vmul.f32 %v1212, %v1310
  %v1375 = vmul.f32 %v1215, %v1311
  %v1376 = vmul.f32 %v1220, %v1312
  %v1377 = vmul.f32 %v1223, %v1313
  %v1378 = vmul.f32 %v1228, %v1314
  %v1379 = vmul.f32 %v1231, %v1315
  %v1380 = vmul.f32 %v1236, %v1316
  %v1381 = vmul.f32 %v1239, %v1317
  %v1382 = vmul.f32 %v1244, %v1318
  %v1383 = vmul.f32 %v1247, %v1319
  %v1384 = vmul.f32 %v1252, %v1320
  %v1385 = vmul.f32 %v1255, %v1321
  %v1386 = vmul.f32 %v1322, 0.044715
  %v1387 = vmul.f32 %v1323, 0.044715
  %v1388 = vmul.f32 %v1324, 0.044715
  %v1389 = vmul.f32 %v1325, 0.044715
  %v1390 = vmul.f32 %v1326, 0.044715
  %v1391 = vmul.f32 %v1327, 0.044715
  %v1392 = vmul.f32 %v1328, 0.044715
  %v1393 = vmul.f32 %v1329, 0.044715
  %v1394 = vmul.f32 %v1330, 0.044715
  %v1395 = vmul.f32 %v1331, 0.044715
  %v1396 = vmul.f32 %v1332, 0.044715
  %v1397 = vmul.f32 %v1333, 0.044715
  %v1398 = vmul.f32 %v1334, 0.044715
  %v1399 = vmul.f32 %v1335, 0.044715
  %v1400 = vmul.f32 %v1336, 0.044715
  %v1401 = vmul.f32 %v1337, 0.044715
  %v1402 = vmul.f32 %v1338, 0.044715
  %v1403 = vmul.f32 %v1339, 0.044715
  %v1404 = vmul.f32 %v1340, 0.044715
  %v1405 = vmul.f32 %v1341, 0.044715
  %v1406 = vmul.f32 %v1342, 0.044715
  %v1407 = vmul.f32 %v1343, 0.044715
  %v1408 = vmul.f32 %v1344, 0.044715
  %v1409 = vmul.f32 %v1345, 0.044715
  %v1410 = vmul.f32 %v1346, 0.044715
  %v1411 = vmul.f32 %v1347, 0.044715
  %v1412 = vmul.f32 %v1348, 0.044715
  %v1413 = vmul.f32 %v1349, 0.044715
  %v1414 = vmul.f32 %v1350, 0.044715
  %v1415 = vmul.f32 %v1351, 0.044715
  %v1416 = vmul.f32 %v1352, 0.044715
  %v1417 = vmul.f32 %v1353, 0.044715
  %v1418 = vmul.f32 %v1354, 0.044715
  %v1419 = vmul.f32 %v1355, 0.044715
  %v1420 = vmul.f32 %v1356, 0.044715
  %v1421 = vmul.f32 %v1357, 0.044715
  %v1422 = vmul.f32 %v1358, 0.044715
  %v1423 = vmul.f32 %v1359, 0.044715
  %v1424 = vmul.f32 %v1360, 0.044715
  %v1425 = vmul.f32 %v1361, 0.044715
  %v1426 = vmul.f32 %v1362, 0.044715
  %v1427 = vmul.f32 %v1363, 0.044715
  %v1428 = vmul.f32 %v1364, 0.044715
  %v1429 = vmul.f32 %v1365, 0.044715
  %v1430 = vmul.f32 %v1366, 0.044715
  %v1431 = vmul.f32 %v1367, 0.044715
  %v1432 = vmul.f32 %v1368, 0.044715
  %v1433 = vmul.f32 %v1369, 0.044715
  %v1434 = vmul.f32 %v1370, 0.044715
  %v1435 = vmul.f32 %v1371, 0.044715
  %v1436 = vmul.f32 %v1372, 0.044715
  %v1437 = vmul.f32 %v1373, 0.044715
  %v1438 = vmul.f32 %v1374, 0.044715
  %v1439 = vmul.f32 %v1375, 0.044715
  %v1440 = vmul.f32 %v1376, 0.044715
  %v1441 = vmul.f32 %v1377, 0.044715
  %v1442 = vmul.f32 %v1378, 0.044715
  %v1443 = vmul.f32 %v1379, 0.044715
  %v1444 = vmul.f32 %v1380, 0.044715
  %v1445 = vmul.f32 %v1381, 0.044715
  %v1446 = vmul.f32 %v1382, 0.044715
  %v1447 = vmul.f32 %v1383, 0.044715
  %v1448 = vmul.f32 %v1384, 0.044715
  %v1449 = vmul.f32 %v1385, 0.044715
  %v1450 = vadd.f32 %v1004, %v1386
  %v1451 = vadd.f32 %v1007, %v1387
  %v1452 = vadd.f32 %v1012, %v1388
  %v1453 = vadd.f32 %v1015, %v1389
  %v1454 = vadd.f32 %v1020, %v1390
  %v1455 = vadd.f32 %v1023, %v1391
  %v1456 = vadd.f32 %v1028, %v1392
  %v1457 = vadd.f32 %v1031, %v1393
  %v1458 = vadd.f32 %v1036, %v1394
  %v1459 = vadd.f32 %v1039, %v1395
  %v1460 = vadd.f32 %v1044, %v1396
  %v1461 = vadd.f32 %v1047, %v1397
  %v1462 = vadd.f32 %v1052, %v1398
  %v1463 = vadd.f32 %v1055, %v1399
  %v1464 = vadd.f32 %v1060, %v1400
  %v1465 = vadd.f32 %v1063, %v1401
  %v1466 = vadd.f32 %v1068, %v1402
  %v1467 = vadd.f32 %v1071, %v1403
  %v1468 = vadd.f32 %v1076, %v1404
  %v1469 = vadd.f32 %v1079, %v1405
  %v1470 = vadd.f32 %v1084, %v1406
  %v1471 = vadd.f32 %v1087, %v1407
  %v1472 = vadd.f32 %v1092, %v1408
  %v1473 = vadd.f32 %v1095, %v1409
  %v1474 = vadd.f32 %v1100, %v1410
  %v1475 = vadd.f32 %v1103, %v1411
  %v1476 = vadd.f32 %v1108, %v1412
  %v1477 = vadd.f32 %v1111, %v1413
  %v1478 = vadd.f32 %v1116, %v1414
  %v1479 = vadd.f32 %v1119, %v1415
  %v1480 = vadd.f32 %v1124, %v1416
  %v1481 = vadd.f32 %v1127, %v1417
  %v1482 = vadd.f32 %v1132, %v1418
  %v1483 = vadd.f32 %v1135, %v1419
  %v1484 = vadd.f32 %v1140, %v1420
  %v1485 = vadd.f32 %v1143, %v1421
  %v1486 = vadd.f32 %v1148, %v1422
  %v1487 = vadd.f32 %v1151, %v1423
  %v1488 = vadd.f32 %v1156, %v1424
  %v1489 = vadd.f32 %v1159, %v1425
  %v1490 = vadd.f32 %v1164, %v1426
  %v1491 = vadd.f32 %v1167, %v1427
  %v1492 = vadd.f32 %v1172, %v1428
  %v1493 = vadd.f32 %v1175, %v1429
  %v1494 = vadd.f32 %v1180, %v1430
  %v1495 = vadd.f32 %v1183, %v1431
  %v1496 = vadd.f32 %v1188, %v1432
  %v1497 = vadd.f32 %v1191, %v1433
  %v1498 = vadd.f32 %v1196, %v1434
  %v1499 = vadd.f32 %v1199, %v1435
  %v1500 = vadd.f32 %v1204, %v1436
  %v1501 = vadd.f32 %v1207, %v1437
  %v1502 = vadd.f32 %v1212, %v1438
  %v1503 = vadd.f32 %v1215, %v1439
  %v1504 = vadd.f32 %v1220, %v1440
  %v1505 = vadd.f32 %v1223, %v1441
  %v1506 = vadd.f32 %v1228, %v1442
  %v1507 = vadd.f32 %v1231, %v1443
  %v1508 = vadd.f32 %v1236, %v1444
  %v1509 = vadd.f32 %v1239, %v1445
  %v1510 = vadd.f32 %v1244, %v1446
  %v1511 = vadd.f32 %v1247, %v1447
  %v1512 = vadd.f32 %v1252, %v1448
  %v1513 = vadd.f32 %v1255, %v1449
  %v1514 = vmul.f32 %v1450, 0.7978846
  %v1515 = vmul.f32 %v1451, 0.7978846
  %v1516 = vmul.f32 %v1452, 0.7978846
  %v1517 = vmul.f32 %v1453, 0.7978846
  %v1518 = vmul.f32 %v1454, 0.7978846
  %v1519 = vmul.f32 %v1455, 0.7978846
  %v1520 = vmul.f32 %v1456, 0.7978846
  %v1521 = vmul.f32 %v1457, 0.7978846
  %v1522 = vmul.f32 %v1458, 0.7978846
  %v1523 = vmul.f32 %v1459, 0.7978846
  %v1524 = vmul.f32 %v1460, 0.7978846
  %v1525 = vmul.f32 %v1461, 0.7978846
  %v1526 = vmul.f32 %v1462, 0.7978846
  %v1527 = vmul.f32 %v1463, 0.7978846
  %v1528 = vmul.f32 %v1464, 0.7978846
  %v1529 = vmul.f32 %v1465, 0.7978846
  %v1530 = vmul.f32 %v1466, 0.7978846
  %v1531 = vmul.f32 %v1467, 0.7978846
  %v1532 = vmul.f32 %v1468, 0.7978846
  %v1533 = vmul.f32 %v1469, 0.7978846
  %v1534 = vmul.f32 %v1470, 0.7978846
  %v1535 = vmul.f32 %v1471, 0.7978846
  %v1536 = vmul.f32 %v1472, 0.7978846
  %v1537 = vmul.f32 %v1473, 0.7978846
  %v1538 = vmul.f32 %v1474, 0.7978846
  %v1539 = vmul.f32 %v1475, 0.7978846
  %v1540 = vmul.f32 %v1476, 0.7978846
  %v1541 = vmul.f32 %v1477, 0.7978846
  %v1542 = vmul.f32 %v1478, 0.7978846
  %v1543 = vmul.f32 %v1479, 0.7978846
  %v1544 = vmul.f32 %v1480, 0.7978846
  %v1545 = vmul.f32 %v1481, 0.7978846
  %v1546 = vmul.f32 %v1482, 0.7978846
  %v1547 = vmul.f32 %v1483, 0.7978846
  %v1548 = vmul.f32 %v1484, 0.7978846
  %v1549 = vmul.f32 %v1485, 0.7978846
  %v1550 = vmul.f32 %v1486, 0.7978846
  %v1551 = vmul.f32 %v1487, 0.7978846
  %v1552 = vmul.f32 %v1488, 0.7978846
  %v1553 = vmul.f32 %v1489, 0.7978846
  %v1554 = vmul.f32 %v1490, 0.7978846
  %v1555 = vmul.f32 %v1491, 0.7978846
  %v1556 = vmul.f32 %v1492, 0.7978846
  %v1557 = vmul.f32 %v1493, 0.7978846
  %v1558 = vmul.f32 %v1494, 0.7978846
  %v1559 = vmul.f32 %v1495, 0.7978846
  %v1560 = vmul.f32 %v1496, 0.7978846
  %v1561 = vmul.f32 %v1497, 0.7978846
  %v1562 = vmul.f32 %v1498, 0.7978846
  %v1563 = vmul.f32 %v1499, 0.7978846
  %v1564 = vmul.f32 %v1500, 0.7978846
  %v1565 = vmul.f32 %v1501, 0.7978846
  %v1566 = vmul.f32 %v1502, 0.7978846
  %v1567 = vmul.f32 %v1503, 0.7978846
  %v1568 = vmul.f32 %v1504, 0.7978846
  %v1569 = vmul.f32 %v1505, 0.7978846
  %v1570 = vmul.f32 %v1506, 0.7978846
  %v1571 = vmul.f32 %v1507, 0.7978846
  %v1572 = vmul.f32 %v1508, 0.7978846
  %v1573 = vmul.f32 %v1509, 0.7978846
  %v1574 = vmul.f32 %v1510, 0.7978846
  %v1575 = vmul.f32 %v1511, 0.7978846
  %v1576 = vmul.f32 %v1512, 0.7978846
  %v1577 = vmul.f32 %v1513, 0.7978846
  %v1578 = vtanh.pop %v1514
  %v1579 = vtanh.pop %v1515
  %v1580 = vtanh.pop %v1516
  %v1581 = vtanh.pop %v1517
  %v1582 = vtanh.pop %v1518
  %v1583 = vtanh.pop %v1519
  %v1584 = vtanh.pop %v1520
  %v1585 = vtanh.pop %v1521
  %v1586 = vtanh.pop %v1522
  %v1587 = vtanh.pop %v1523
  %v1588 = vtanh.pop %v1524
  %v1589 = vtanh.pop %v1525
  %v1590 = vtanh.pop %v1526
  %v1591 = vtanh.pop %v1527
  %v1592 = vtanh.pop %v1528
  %v1593 = vtanh.pop %v1529
  %v1594 = vtanh.pop %v1530
  %v1595 = vtanh.pop %v1531
  %v1596 = vtanh.pop %v1532
  %v1597 = vtanh.pop %v1533
  %v1598 = vtanh.pop %v1534
  %v1599 = vtanh.pop %v1535
  %v1600 = vtanh.pop %v1536
  %v1601 = vtanh.pop %v1537
  %v1602 = vtanh.pop %v1538
  %v1603 = vtanh.pop %v1539
  %v1604 = vtanh.pop %v1540
  %v1605 = vtanh.pop %v1541
  %v1606 = vtanh.pop %v1542
  %v1607 = vtanh.pop %v1543
  %v1608 = vtanh.pop %v1544
  %v1609 = vtanh.pop %v1545
  %v1610 = vtanh.pop %v1546
  %v1611 = vtanh.pop %v1547
  %v1612 = vtanh.pop %v1548
  %v1613 = vtanh.pop %v1549
  %v1614 = vtanh.pop %v1550
  %v1615 = vtanh.pop %v1551
  %v1616 = vtanh.pop %v1552
  %v1617 = vtanh.pop %v1553
  %v1618 = vtanh.pop %v1554
  %v1619 = vtanh.pop %v1555
  %v1620 = vtanh.pop %v1556
  %v1621 = vtanh.pop %v1557
  %v1622 = vtanh.pop %v1558
  %v1623 = vtanh.pop %v1559
  %v1624 = vtanh.pop %v1560
  %v1625 = vtanh.pop %v1561
  %v1626 = vtanh.pop %v1562
  %v1627 = vtanh.pop %v1563
  %v1628 = vtanh.pop %v1564
  %v1629 = vtanh.pop %v1565
  %v1630 = vtanh.pop %v1566
  %v1631 = vtanh.pop %v1567
  %v1632 = vtanh.pop %v1568
  %v1633 = vtanh.pop %v1569
  %v1634 = vtanh.pop %v1570
  %v1635 = vtanh.pop %v1571
  %v1636 = vtanh.pop %v1572
  %v1637 = vtanh.pop %v1573
  %v1638 = vtanh.pop %v1574
  %v1639 = vtanh.pop %v1575
  %v1640 = vtanh.pop %v1576
  %v1641 = vtanh.pop %v1577
  %v1642 = vadd.f32 %v1578, 1.0
  %v1643 = vadd.f32 %v1579, 1.0
  %v1644 = vadd.f32 %v1580, 1.0
  %v1645 = vadd.f32 %v1581, 1.0
  %v1646 = vadd.f32 %v1582, 1.0
  %v1647 = vadd.f32 %v1583, 1.0
  %v1648 = vadd.f32 %v1584, 1.0
  %v1649 = vadd.f32 %v1585, 1.0
  %v1650 = vadd.f32 %v1586, 1.0
  %v1651 = vadd.f32 %v1587, 1.0
  %v1652 = vadd.f32 %v1588, 1.0
  %v1653 = vadd.f32 %v1589, 1.0
  %v1654 = vadd.f32 %v1590, 1.0
  %v1655 = vadd.f32 %v1591, 1.0
  %v1656 = vadd.f32 %v1592, 1.0
  %v1657 = vadd.f32 %v1593, 1.0
  %v1658 = vadd.f32 %v1594, 1.0
  %v1659 = vadd.f32 %v1595, 1.0
  %v1660 = vadd.f32 %v1596, 1.0
  %v1661 = vadd.f32 %v1597, 1.0
  %v1662 = vadd.f32 %v1598, 1.0
  %v1663 = vadd.f32 %v1599, 1.0
  %v1664 = vadd.f32 %v1600, 1.0
  %v1665 = vadd.f32 %v1601, 1.0
  %v1666 = vadd.f32 %v1602, 1.0
  %v1667 = vadd.f32 %v1603, 1.0
  %v1668 = vadd.f32 %v1604, 1.0
  %v1669 = vadd.f32 %v1605, 1.0
  %v1670 = vadd.f32 %v1606, 1.0
  %v1671 = vadd.f32 %v1607, 1.0
  %v1672 = vadd.f32 %v1608, 1.0
  %v1673 = vadd.f32 %v1609, 1.0
  %v1674 = vadd.f32 %v1610, 1.0
  %v1675 = vadd.f32 %v1611, 1.0
  %v1676 = vadd.f32 %v1612, 1.0
  %v1677 = vadd.f32 %v1613, 1.0
  %v1678 = vadd.f32 %v1614, 1.0
  %v1679 = vadd.f32 %v1615, 1.0
  %v1680 = vadd.f32 %v1616, 1.0
  %v1681 = vadd.f32 %v1617, 1.0
  %v1682 = vadd.f32 %v1618, 1.0
  %v1683 = vadd.f32 %v1619, 1.0
  %v1684 = vadd.f32 %v1620, 1.0
  %v1685 = vadd.f32 %v1621, 1.0
  %v1686 = vadd.f32 %v1622, 1.0
  %v1687 = vadd.f32 %v1623, 1.0
  %v1688 = vadd.f32 %v1624, 1.0
  %v1689 = vadd.f32 %v1625, 1.0
  %v1690 = vadd.f32 %v1626, 1.0
  %v1691 = vadd.f32 %v1627, 1.0
  %v1692 = vadd.f32 %v1628, 1.0
  %v1693 = vadd.f32 %v1629, 1.0
  %v1694 = vadd.f32 %v1630, 1.0
  %v1695 = vadd.f32 %v1631, 1.0
  %v1696 = vadd.f32 %v1632, 1.0
  %v1697 = vadd.f32 %v1633, 1.0
  %v1698 = vadd.f32 %v1634, 1.0
  %v1699 = vadd.f32 %v1635, 1.0
  %v1700 = vadd.f32 %v1636, 1.0
  %v1701 = vadd.f32 %v1637, 1.0
  %v1702 = vadd.f32 %v1638, 1.0
  %v1703 = vadd.f32 %v1639, 1.0
  %v1704 = vadd.f32 %v1640, 1.0
  %v1705 = vadd.f32 %v1641, 1.0
  %v1706 = vmul.f32 %v1642, 0.5
  %v1707 = vmul.f32 %v1643, 0.5
  %v1708 = vmul.f32 %v1644, 0.5
  %v1709 = vmul.f32 %v1645, 0.5
  %v1710 = vmul.f32 %v1646, 0.5
  %v1711 = vmul.f32 %v1647, 0.5
  %v1712 = vmul.f32 %v1648, 0.5
  %v1713 = vmul.f32 %v1649, 0.5
  %v1714 = vmul.f32 %v1650, 0.5
  %v1715 = vmul.f32 %v1651, 0.5
  %v1716 = vmul.f32 %v1652, 0.5
  %v1717 = vmul.f32 %v1653, 0.5
  %v1718 = vmul.f32 %v1654, 0.5
  %v1719 = vmul.f32 %v1655, 0.5
  %v1720 = vmul.f32 %v1656, 0.5
  %v1721 = vmul.f32 %v1657, 0.5
  %v1722 = vmul.f32 %v1658, 0.5
  %v1723 = vmul.f32 %v1659, 0.5
  %v1724 = vmul.f32 %v1660, 0.5
  %v1725 = vmul.f32 %v1661, 0.5
  %v1726 = vmul.f32 %v1662, 0.5
  %v1727 = vmul.f32 %v1663, 0.5
  %v1728 = vmul.f32 %v1664, 0.5
  %v1729 = vmul.f32 %v1665, 0.5
  %v1730 = vmul.f32 %v1666, 0.5
  %v1731 = vmul.f32 %v1667, 0.5
  %v1732 = vmul.f32 %v1668, 0.5
  %v1733 = vmul.f32 %v1669, 0.5
  %v1734 = vmul.f32 %v1670, 0.5
  %v1735 = vmul.f32 %v1671, 0.5
  %v1736 = vmul.f32 %v1672, 0.5
  %v1737 = vmul.f32 %v1673, 0.5
  %v1738 = vmul.f32 %v1674, 0.5
  %v1739 = vmul.f32 %v1675, 0.5
  %v1740 = vmul.f32 %v1676, 0.5
  %v1741 = vmul.f32 %v1677, 0.5
  %v1742 = vmul.f32 %v1678, 0.5
  %v1743 = vmul.f32 %v1679, 0.5
  %v1744 = vmul.f32 %v1680, 0.5
  %v1745 = vmul.f32 %v1681, 0.5
  %v1746 = vmul.f32 %v1682, 0.5
  %v1747 = vmul.f32 %v1683, 0.5
  %v1748 = vmul.f32 %v1684, 0.5
  %v1749 = vmul.f32 %v1685, 0.5
  %v1750 = vmul.f32 %v1686, 0.5
  %v1751 = vmul.f32 %v1687, 0.5
  %v1752 = vmul.f32 %v1688, 0.5
  %v1753 = vmul.f32 %v1689, 0.5
  %v1754 = vmul.f32 %v1690, 0.5
  %v1755 = vmul.f32 %v1691, 0.5
  %v1756 = vmul.f32 %v1692, 0.5
  %v1757 = vmul.f32 %v1693, 0.5
  %v1758 = vmul.f32 %v1694, 0.5
  %v1759 = vmul.f32 %v1695, 0.5
  %v1760 = vmul.f32 %v1696, 0.5
  %v1761 = vmul.f32 %v1697, 0.5
  %v1762 = vmul.f32 %v1698, 0.5
  %v1763 = vmul.f32 %v1699, 0.5
  %v1764 = vmul.f32 %v1700, 0.5
  %v1765 = vmul.f32 %v1701, 0.5
  %v1766 = vmul.f32 %v1702, 0.5
  %v1767 = vmul.f32 %v1703, 0.5
  %v1768 = vmul.f32 %v1704, 0.5
  %v1769 = vmul.f32 %v1705, 0.5
  %v1770 = vmul.f32 %v1004, %v1706
  %v1771 = vmul.f32 %v1007, %v1707
  %v1772 = vmul.f32 %v1012, %v1708
  %v1773 = vmul.f32 %v1015, %v1709
  %v1774 = vmul.f32 %v1020, %v1710
  %v1775 = vmul.f32 %v1023, %v1711
  %v1776 = vmul.f32 %v1028, %v1712
  %v1777 = vmul.f32 %v1031, %v1713
  %v1778 = vmul.f32 %v1036, %v1714
  %v1779 = vmul.f32 %v1039, %v1715
  %v1780 = vmul.f32 %v1044, %v1716
  %v1781 = vmul.f32 %v1047, %v1717
  %v1782 = vmul.f32 %v1052, %v1718
  %v1783 = vmul.f32 %v1055, %v1719
  %v1784 = vmul.f32 %v1060, %v1720
  %v1785 = vmul.f32 %v1063, %v1721
  %v1786 = vmul.f32 %v1068, %v1722
  %v1787 = vmul.f32 %v1071, %v1723
  %v1788 = vmul.f32 %v1076, %v1724
  %v1789 = vmul.f32 %v1079, %v1725
  %v1790 = vmul.f32 %v1084, %v1726
  %v1791 = vmul.f32 %v1087, %v1727
  %v1792 = vmul.f32 %v1092, %v1728
  %v1793 = vmul.f32 %v1095, %v1729
  %v1794 = vmul.f32 %v1100, %v1730
  %v1795 = vmul.f32 %v1103, %v1731
  %v1796 = vmul.f32 %v1108, %v1732
  %v1797 = vmul.f32 %v1111, %v1733
  %v1798 = vmul.f32 %v1116, %v1734
  %v1799 = vmul.f32 %v1119, %v1735
  %v1800 = vmul.f32 %v1124, %v1736
  %v1801 = vmul.f32 %v1127, %v1737
  %v1802 = vmul.f32 %v1132, %v1738
  %v1803 = vmul.f32 %v1135, %v1739
  %v1804 = vmul.f32 %v1140, %v1740
  %v1805 = vmul.f32 %v1143, %v1741
  %v1806 = vmul.f32 %v1148, %v1742
  %v1807 = vmul.f32 %v1151, %v1743
  %v1808 = vmul.f32 %v1156, %v1744
  %v1809 = vmul.f32 %v1159, %v1745
  %v1810 = vmul.f32 %v1164, %v1746
  %v1811 = vmul.f32 %v1167, %v1747
  %v1812 = vmul.f32 %v1172, %v1748
  %v1813 = vmul.f32 %v1175, %v1749
  %v1814 = vmul.f32 %v1180, %v1750
  %v1815 = vmul.f32 %v1183, %v1751
  %v1816 = vmul.f32 %v1188, %v1752
  %v1817 = vmul.f32 %v1191, %v1753
  %v1818 = vmul.f32 %v1196, %v1754
  %v1819 = vmul.f32 %v1199, %v1755
  %v1820 = vmul.f32 %v1204, %v1756
  %v1821 = vmul.f32 %v1207, %v1757
  %v1822 = vmul.f32 %v1212, %v1758
  %v1823 = vmul.f32 %v1215, %v1759
  %v1824 = vmul.f32 %v1220, %v1760
  %v1825 = vmul.f32 %v1223, %v1761
  %v1826 = vmul.f32 %v1228, %v1762
  %v1827 = vmul.f32 %v1231, %v1763
  %v1828 = vmul.f32 %v1236, %v1764
  %v1829 = vmul.f32 %v1239, %v1765
  %v1830 = vmul.f32 %v1244, %v1766
  %v1831 = vmul.f32 %v1247, %v1767
  %v1832 = vmul.f32 %v1252, %v1768
  %v1833 = vmul.f32 %v1255, %v1769
  %v1834 = vpack.c.bf16 %v1771, %v1770
  %v1835 = vpack.c.bf16 %v1773, %v1772
  %v1836 = vpack.c.bf16 %v1775, %v1774
  %v1837 = vpack.c.bf16 %v1777, %v1776
  %v1838 = vpack.c.bf16 %v1779, %v1778
  %v1839 = vpack.c.bf16 %v1781, %v1780
  %v1840 = vpack.c.bf16 %v1783, %v1782
  %v1841 = vpack.c.bf16 %v1785, %v1784
  %v1842 = vpack.c.bf16 %v1787, %v1786
  %v1843 = vpack.c.bf16 %v1789, %v1788
  %v1844 = vpack.c.bf16 %v1791, %v1790
  %v1845 = vpack.c.bf16 %v1793, %v1792
  %v1846 = vpack.c.bf16 %v1795, %v1794
  %v1847 = vpack.c.bf16 %v1797, %v1796
  %v1848 = vpack.c.bf16 %v1799, %v1798
  %v1849 = vpack.c.bf16 %v1801, %v1800
  %v1850 = vpack.c.bf16 %v1803, %v1802
  %v1851 = vpack.c.bf16 %v1805, %v1804
  %v1852 = vpack.c.bf16 %v1807, %v1806
  %v1853 = vpack.c.bf16 %v1809, %v1808
  %v1854 = vpack.c.bf16 %v1811, %v1810
  %v1855 = vpack.c.bf16 %v1813, %v1812
  %v1856 = vpack.c.bf16 %v1815, %v1814
  %v1857 = vpack.c.bf16 %v1817, %v1816
  %v1858 = vpack.c.bf16 %v1819, %v1818
  %v1859 = vpack.c.bf16 %v1821, %v1820
  %v1860 = vpack.c.bf16 %v1823, %v1822
  %v1861 = vpack.c.bf16 %v1825, %v1824
  %v1862 = vpack.c.bf16 %v1827, %v1826
  %v1863 = vpack.c.bf16 %v1829, %v1828
  %v1864 = vpack.c.bf16 %v1831, %v1830
  %v1865 = vpack.c.bf16 %v1833, %v1832
  %v1866 = vld [vmem:[%s5] sm:$0xf]
  %v1867 = vld [vmem:[%s5 + $0x4] sm:$0xf]
  %v1868 = vld [vmem:[%s5 + $0x8] sm:$0xf]
  %v1869 = vld [vmem:[%s5 + $0xc] sm:$0xf]
  %v1870 = vld [vmem:[%s5 + $0x10] sm:$0xf]
  %v1871 = vld [vmem:[%s5 + $0x14] sm:$0xf]
  %v1872 = vld [vmem:[%s5 + $0x18] sm:$0xf]
  %v1873 = vld [vmem:[%s5 + $0x1c] sm:$0xf]
  %v1874 = vld [vmem:[%s5 + $0x20] sm:$0xf]
  %v1875 = vld [vmem:[%s5 + $0x24] sm:$0xf]
  %v1876 = vld [vmem:[%s5 + $0x28] sm:$0xf]
  %v1877 = vld [vmem:[%s5 + $0x2c] sm:$0xf]
  %v1878 = vld [vmem:[%s5 + $0x30] sm:$0xf]
  %v1879 = vld [vmem:[%s5 + $0x34] sm:$0xf]
  %v1880 = vld [vmem:[%s5 + $0x38] sm:$0xf]
  %v1881 = vld [vmem:[%s5 + $0x3c] sm:$0xf]
  %v1882 = vld [vmem:[%s6] sm:$0x1]
  %v1884 = vlaneseq
  %v1885 = vshrl.u32 %v1884, 7
  %v1886 = vsub.s32 0, %v1885
  %v1887 = vrot.slane %v1882, %v1886
  %v1905 = vunpack.c.l.b16 %v1866
  %v1906 = vunpack.c.l.b16 %v1867
  %v1907 = vunpack.c.l.b16 %v1868
  %v1908 = vunpack.c.l.b16 %v1869
  %v1909 = vunpack.c.l.b16 %v1870
  %v1910 = vunpack.c.l.b16 %v1871
  %v1911 = vunpack.c.l.b16 %v1872
  %v1912 = vunpack.c.l.b16 %v1873
  %v1913 = vunpack.c.l.b16 %v1874
  %v1914 = vunpack.c.l.b16 %v1875
  %v1915 = vunpack.c.l.b16 %v1876
  %v1916 = vunpack.c.l.b16 %v1877
  %v1917 = vunpack.c.l.b16 %v1878
  %v1918 = vunpack.c.l.b16 %v1879
  %v1919 = vunpack.c.l.b16 %v1880
  %v1920 = vunpack.c.l.b16 %v1881
  %v1921 = vpack.c.b16 %v1906, %v1905
  %v1922 = vpack.c.b16 %v1908, %v1907
  %v1923 = vpack.c.b16 %v1910, %v1909
  %v1924 = vpack.c.b16 %v1912, %v1911
  %v1925 = vpack.c.b16 %v1914, %v1913
  %v1926 = vpack.c.b16 %v1916, %v1915
  %v1927 = vpack.c.b16 %v1918, %v1917
  %v1928 = vpack.c.b16 %v1920, %v1919
  %1937 = vmatprep.subr.bf16.mxu0 0
  %1938 = vmatpush1.bf16.msra.mxu0 %v1921
  %1939 = vmatprep.subr.bf16.mxu0 0
  %1940 = vmatpush1.bf16.msra.mxu0 %v1922
  %1941 = vmatprep.subr.bf16.mxu0 0
  %1942 = vmatpush1.bf16.msra.mxu0 %v1923
  %1943 = vmatprep.subr.bf16.mxu0 0
  %1944 = vmatpush1.bf16.msra.mxu0 %v1924
  %1945 = vmatprep.subr.bf16.mxu0 0
  %1946 = vmatpush1.bf16.msra.mxu0 %v1925
  %1947 = vmatprep.subr.bf16.mxu0 0
  %1948 = vmatpush1.bf16.msra.mxu0 %v1926
  %1949 = vmatprep.subr.bf16.mxu0 0
  %1950 = vmatpush1.bf16.msra.mxu0 %v1927
  %1951 = vmatprep.subr.bf16.mxu0 0
  %1952 = vmatpush1.bf16.msra.mxu0 %v1928
  %1953 = vmatprep.subr.bf16.mxu0 0
  %1954 = vmatpush1.bf16.msra.mxu0 0
  %1955 = vmatprep.subr.bf16.mxu0 0
  %1956 = vmatpush1.bf16.msra.mxu0 0
  %1957 = vmatprep.subr.bf16.mxu0 0
  %1958 = vmatpush1.bf16.msra.mxu0 0
  %1959 = vmatprep.subr.bf16.mxu0 0
  %1960 = vmatpush1.bf16.msra.mxu0 0
  %1961 = vmatprep.subr.bf16.mxu0 0
  %1962 = vmatpush1.bf16.msra.mxu0 0
  %1963 = vmatprep.subr.bf16.mxu0 0
  %1964 = vmatpush1.bf16.msra.mxu0 0
  %1965 = vmatprep.subr.bf16.mxu0 0
  %1966 = vmatpush1.bf16.msra.mxu0 0
  %1967 = vmatprep.subr.bf16.mxu0 0
  %1968 = vmatpush1.bf16.msra.mxu0 0
  %1969 = vmatprep.mubr.bf16.mxu0 0
  %1970 = vmatmul.mubr.bf16.gmra.mrb[0].mxu0 %v1834
  %v1971 = vpop.f32.mrb[0].mxu0
  %v1972 = vadd.f32 %v1887, %v1971
  %v1973 = vpop.f32.mrb[0].mxu0
  %v1974 = vpop.f32.mrb[0].mxu0
  %v1975 = vadd.f32 %v1887, %v1974
  %v1976 = vpop.f32.mrb[0].mxu0
  %1977 = vmatprep.mubr.bf16.mxu0 0
  %1978 = vmatmul.mubr.bf16.gmra.mrb[0].mxu0 %v1835
  %v1979 = vpop.f32.mrb[0].mxu0
  %v1980 = vadd.f32 %v1887, %v1979
  %v1981 = vpop.f32.mrb[0].mxu0
  %v1982 = vpop.f32.mrb[0].mxu0
  %v1983 = vadd.f32 %v1887, %v1982
  %v1984 = vpop.f32.mrb[0].mxu0
  %1985 = vmatprep.mubr.bf16.mxu0 0
  %1986 = vmatmul.mubr.bf16.gmra.mrb[0].mxu0 %v1836
  %v1987 = vpop.f32.mrb[0].mxu0
  %v1988 = vadd.f32 %v1887, %v1987
  %v1989 = vpop.f32.mrb[0].mxu0
  %v1990 = vpop.f32.mrb[0].mxu0
  %v1991 = vadd.f32 %v1887, %v1990
  %v1992 = vpop.f32.mrb[0].mxu0
  %1993 = vmatprep.mubr.bf16.mxu0 0
  %1994 = vmatmul.mubr.bf16.gmra.mrb[0].mxu0 %v1837
  %v1995 = vpop.f32.mrb[0].mxu0
  %v1996 = vadd.f32 %v1887, %v1995
  %v1997 = vpop.f32.mrb[0].mxu0
  %v1998 = vpop.f32.mrb[0].mxu0
  %v1999 = vadd.f32 %v1887, %v1998
  %v2000 = vpop.f32.mrb[0].mxu0
  %2001 = vmatprep.mubr.bf16.mxu0 0
  %2002 = vmatmul.mubr.bf16.gmra.mrb[0].mxu0 %v1838
  %v2003 = vpop.f32.mrb[0].mxu0
  %v2004 = vadd.f32 %v1887, %v2003
  %v2005 = vpop.f32.mrb[0].mxu0
  %v2006 = vpop.f32.mrb[0].mxu0
  %v2007 = vadd.f32 %v1887, %v2006
  %v2008 = vpop.f32.mrb[0].mxu0
  %2009 = vmatprep.mubr.bf16.mxu0 0
  %2010 = vmatmul.mubr.bf16.gmra.mrb[0].mxu0 %v1839
  %v2011 = vpop.f32.mrb[0].mxu0
  %v2012 = vadd.f32 %v1887, %v2011
  %v2013 = vpop.f32.mrb[0].mxu0
  %v2014 = vpop.f32.mrb[0].mxu0
  %v2015 = vadd.f32 %v1887, %v2014
  %v2016 = vpop.f32.mrb[0].mxu0
  %2017 = vmatprep.mubr.bf16.mxu0 0
  %2018 = vmatmul.mubr.bf16.gmra.mrb[0].mxu0 %v1840
  %v2019 = vpop.f32.mrb[0].mxu0
  %v2020 = vadd.f32 %v1887, %v2019
  %v2021 = vpop.f32.mrb[0].mxu0
  %v2022 = vpop.f32.mrb[0].mxu0
  %v2023 = vadd.f32 %v1887, %v2022
  %v2024 = vpop.f32.mrb[0].mxu0
  %2025 = vmatprep.mubr.bf16.mxu0 0
  %2026 = vmatmul.mubr.bf16.gmra.mrb[0].mxu0 %v1841
  %v2027 = vpop.f32.mrb[0].mxu0
  %v2028 = vadd.f32 %v1887, %v2027
  %v2029 = vpop.f32.mrb[0].mxu0
  %v2030 = vpop.f32.mrb[0].mxu0
  %v2031 = vadd.f32 %v1887, %v2030
  %v2032 = vpop.f32.mrb[0].mxu0
  %2033 = vmatprep.mubr.bf16.mxu0 0
  %2034 = vmatmul.mubr.bf16.gmra.mrb[0].mxu0 %v1842
  %v2035 = vpop.f32.mrb[0].mxu0
  %v2036 = vadd.f32 %v1887, %v2035
  %v2037 = vpop.f32.mrb[0].mxu0
  %v2038 = vpop.f32.mrb[0].mxu0
  %v2039 = vadd.f32 %v1887, %v2038
  %v2040 = vpop.f32.mrb[0].mxu0
  %2041 = vmatprep.mubr.bf16.mxu0 0
  %2042 = vmatmul.mubr.bf16.gmra.mrb[0].mxu0 %v1843
  %v2043 = vpop.f32.mrb[0].mxu0
  %v2044 = vadd.f32 %v1887, %v2043
  %v2045 = vpop.f32.mrb[0].mxu0
  %v2046 = vpop.f32.mrb[0].mxu0
  %v2047 = vadd.f32 %v1887, %v2046
  %v2048 = vpop.f32.mrb[0].mxu0
  %2049 = vmatprep.mubr.bf16.mxu0 0
  %2050 = vmatmul.mubr.bf16.gmra.mrb[0].mxu0 %v1844
  %v2051 = vpop.f32.mrb[0].mxu0
  %v2052 = vadd.f32 %v1887, %v2051
  %v2053 = vpop.f32.mrb[0].mxu0
  %v2054 = vpop.f32.mrb[0].mxu0
  %v2055 = vadd.f32 %v1887, %v2054
  %v2056 = vpop.f32.mrb[0].mxu0
  %2057 = vmatprep.mubr.bf16.mxu0 0
  %2058 = vmatmul.mubr.bf16.gmra.mrb[0].mxu0 %v1845
  %v2059 = vpop.f32.mrb[0].mxu0
  %v2060 = vadd.f32 %v1887, %v2059
  %v2061 = vpop.f32.mrb[0].mxu0
  %v2062 = vpop.f32.mrb[0].mxu0
  %v2063 = vadd.f32 %v1887, %v2062
  %v2064 = vpop.f32.mrb[0].mxu0
  %2065 = vmatprep.mubr.bf16.mxu0 0
  %2066 = vmatmul.mubr.bf16.gmra.mrb[0].mxu0 %v1846
  %v2067 = vpop.f32.mrb[0].mxu0
  %v2068 = vadd.f32 %v1887, %v2067
  %v2069 = vpop.f32.mrb[0].mxu0
  %v2070 = vpop.f32.mrb[0].mxu0
  %v2071 = vadd.f32 %v1887, %v2070
  %v2072 = vpop.f32.mrb[0].mxu0
  %2073 = vmatprep.mubr.bf16.mxu0 0
  %2074 = vmatmul.mubr.bf16.gmra.mrb[0].mxu0 %v1847
  %v2075 = vpop.f32.mrb[0].mxu0
  %v2076 = vadd.f32 %v1887, %v2075
  %v2077 = vpop.f32.mrb[0].mxu0
  %v2078 = vpop.f32.mrb[0].mxu0
  %v2079 = vadd.f32 %v1887, %v2078
  %v2080 = vpop.f32.mrb[0].mxu0
  %2081 = vmatprep.mubr.bf16.mxu0 0
  %2082 = vmatmul.mubr.bf16.gmra.mrb[0].mxu0 %v1848
  %v2083 = vpop.f32.mrb[0].mxu0
  %v2084 = vadd.f32 %v1887, %v2083
  %v2085 = vpop.f32.mrb[0].mxu0
  %v2086 = vpop.f32.mrb[0].mxu0
  %v2087 = vadd.f32 %v1887, %v2086
  %v2088 = vpop.f32.mrb[0].mxu0
  %2089 = vmatprep.mubr.bf16.mxu0 0
  %2090 = vmatmul.mubr.bf16.gmra.mrb[0].mxu0 %v1849
  %v2091 = vpop.f32.mrb[0].mxu0
  %v2092 = vadd.f32 %v1887, %v2091
  %v2093 = vpop.f32.mrb[0].mxu0
  %v2094 = vpop.f32.mrb[0].mxu0
  %v2095 = vadd.f32 %v1887, %v2094
  %v2096 = vpop.f32.mrb[0].mxu0
  %2097 = vmatprep.mubr.bf16.mxu0 0
  %2098 = vmatmul.mubr.bf16.gmra.mrb[0].mxu0 %v1850
  %v2099 = vpop.f32.mrb[0].mxu0
  %v2100 = vadd.f32 %v1887, %v2099
  %v2101 = vpop.f32.mrb[0].mxu0
  %v2102 = vpop.f32.mrb[0].mxu0
  %v2103 = vadd.f32 %v1887, %v2102
  %v2104 = vpop.f32.mrb[0].mxu0
  %2105 = vmatprep.mubr.bf16.mxu0 0
  %2106 = vmatmul.mubr.bf16.gmra.mrb[0].mxu0 %v1851
  %v2107 = vpop.f32.mrb[0].mxu0
  %v2108 = vadd.f32 %v1887, %v2107
  %v2109 = vpop.f32.mrb[0].mxu0
  %v2110 = vpop.f32.mrb[0].mxu0
  %v2111 = vadd.f32 %v1887, %v2110
  %v2112 = vpop.f32.mrb[0].mxu0
  %2113 = vmatprep.mubr.bf16.mxu0 0
  %2114 = vmatmul.mubr.bf16.gmra.mrb[0].mxu0 %v1852
  %v2115 = vpop.f32.mrb[0].mxu0
  %v2116 = vadd.f32 %v1887, %v2115
  %v2117 = vpop.f32.mrb[0].mxu0
  %v2118 = vpop.f32.mrb[0].mxu0
  %v2119 = vadd.f32 %v1887, %v2118
  %v2120 = vpop.f32.mrb[0].mxu0
  %2121 = vmatprep.mubr.bf16.mxu0 0
  %2122 = vmatmul.mubr.bf16.gmra.mrb[0].mxu0 %v1853
  %v2123 = vpop.f32.mrb[0].mxu0
  %v2124 = vadd.f32 %v1887, %v2123
  %v2125 = vpop.f32.mrb[0].mxu0
  %v2126 = vpop.f32.mrb[0].mxu0
  %v2127 = vadd.f32 %v1887, %v2126
  %v2128 = vpop.f32.mrb[0].mxu0
  %2129 = vmatprep.mubr.bf16.mxu0 0
  %2130 = vmatmul.mubr.bf16.gmra.mrb[0].mxu0 %v1854
  %v2131 = vpop.f32.mrb[0].mxu0
  %v2132 = vadd.f32 %v1887, %v2131
  %v2133 = vpop.f32.mrb[0].mxu0
  %v2134 = vpop.f32.mrb[0].mxu0
  %v2135 = vadd.f32 %v1887, %v2134
  %v2136 = vpop.f32.mrb[0].mxu0
  %2137 = vmatprep.mubr.bf16.mxu0 0
  %2138 = vmatmul.mubr.bf16.gmra.mrb[0].mxu0 %v1855
  %v2139 = vpop.f32.mrb[0].mxu0
  %v2140 = vadd.f32 %v1887, %v2139
  %v2141 = vpop.f32.mrb[0].mxu0
  %v2142 = vpop.f32.mrb[0].mxu0
  %v2143 = vadd.f32 %v1887, %v2142
  %v2144 = vpop.f32.mrb[0].mxu0
  %2145 = vmatprep.mubr.bf16.mxu0 0
  %2146 = vmatmul.mubr.bf16.gmra.mrb[0].mxu0 %v1856
  %v2147 = vpop.f32.mrb[0].mxu0
  %v2148 = vadd.f32 %v1887, %v2147
  %v2149 = vpop.f32.mrb[0].mxu0
  %v2150 = vpop.f32.mrb[0].mxu0
  %v2151 = vadd.f32 %v1887, %v2150
  %v2152 = vpop.f32.mrb[0].mxu0
  %2153 = vmatprep.mubr.bf16.mxu0 0
  %2154 = vmatmul.mubr.bf16.gmra.mrb[0].mxu0 %v1857
  %v2155 = vpop.f32.mrb[0].mxu0
  %v2156 = vadd.f32 %v1887, %v2155
  %v2157 = vpop.f32.mrb[0].mxu0
  %v2158 = vpop.f32.mrb[0].mxu0
  %v2159 = vadd.f32 %v1887, %v2158
  %v2160 = vpop.f32.mrb[0].mxu0
  %2161 = vmatprep.mubr.bf16.mxu0 0
  %2162 = vmatmul.mubr.bf16.gmra.mrb[0].mxu0 %v1858
  %v2163 = vpop.f32.mrb[0].mxu0
  %v2164 = vadd.f32 %v1887, %v2163
  %v2165 = vpop.f32.mrb[0].mxu0
  %v2166 = vpop.f32.mrb[0].mxu0
  %v2167 = vadd.f32 %v1887, %v2166
  %v2168 = vpop.f32.mrb[0].mxu0
  %2169 = vmatprep.mubr.bf16.mxu0 0
  %2170 = vmatmul.mubr.bf16.gmra.mrb[0].mxu0 %v1859
  %v2171 = vpop.f32.mrb[0].mxu0
  %v2172 = vadd.f32 %v1887, %v2171
  %v2173 = vpop.f32.mrb[0].mxu0
  %v2174 = vpop.f32.mrb[0].mxu0
  %v2175 = vadd.f32 %v1887, %v2174
  %v2176 = vpop.f32.mrb[0].mxu0
  %2177 = vmatprep.mubr.bf16.mxu0 0
  %2178 = vmatmul.mubr.bf16.gmra.mrb[0].mxu0 %v1860
  %v2179 = vpop.f32.mrb[0].mxu0
  %v2180 = vadd.f32 %v1887, %v2179
  %v2181 = vpop.f32.mrb[0].mxu0
  %v2182 = vpop.f32.mrb[0].mxu0
  %v2183 = vadd.f32 %v1887, %v2182
  %v2184 = vpop.f32.mrb[0].mxu0
  %2185 = vmatprep.mubr.bf16.mxu0 0
  %2186 = vmatmul.mubr.bf16.gmra.mrb[0].mxu0 %v1861
  %v2187 = vpop.f32.mrb[0].mxu0
  %v2188 = vadd.f32 %v1887, %v2187
  %v2189 = vpop.f32.mrb[0].mxu0
  %v2190 = vpop.f32.mrb[0].mxu0
  %v2191 = vadd.f32 %v1887, %v2190
  %v2192 = vpop.f32.mrb[0].mxu0
  %2193 = vmatprep.mubr.bf16.mxu0 0
  %2194 = vmatmul.mubr.bf16.gmra.mrb[0].mxu0 %v1862
  %v2195 = vpop.f32.mrb[0].mxu0
  %v2196 = vadd.f32 %v1887, %v2195
  %v2197 = vpop.f32.mrb[0].mxu0
  %v2198 = vpop.f32.mrb[0].mxu0
  %v2199 = vadd.f32 %v1887, %v2198
  %v2200 = vpop.f32.mrb[0].mxu0
  %2201 = vmatprep.mubr.bf16.mxu0 0
  %2202 = vmatmul.mubr.bf16.gmra.mrb[0].mxu0 %v1863
  %v2203 = vpop.f32.mrb[0].mxu0
  %v2204 = vadd.f32 %v1887, %v2203
  %v2205 = vpop.f32.mrb[0].mxu0
  %v2206 = vpop.f32.mrb[0].mxu0
  %v2207 = vadd.f32 %v1887, %v2206
  %v2208 = vpop.f32.mrb[0].mxu0
  %2209 = vmatprep.mubr.bf16.mxu0 0
  %2210 = vmatmul.mubr.bf16.gmra.mrb[0].mxu0 %v1864
  %v2211 = vpop.f32.mrb[0].mxu0
  %v2212 = vadd.f32 %v1887, %v2211
  %v2213 = vpop.f32.mrb[0].mxu0
  %v2214 = vpop.f32.mrb[0].mxu0
  %v2215 = vadd.f32 %v1887, %v2214
  %v2216 = vpop.f32.mrb[0].mxu0
  %2217 = vmatprep.mubr.bf16.mxu0 0
  %2218 = vmatmul.mubr.bf16.gmra.mrb[0].mxu0 %v1865
  %v2219 = vpop.f32.mrb[0].mxu0
  %v2220 = vadd.f32 %v1887, %v2219
  %v2221 = vpop.f32.mrb[0].mxu0
  %v2222 = vpop.f32.mrb[0].mxu0
  %v2223 = vadd.f32 %v1887, %v2222
  %v2224 = vpop.f32.mrb[0].mxu0
  %2225 = vdwg.mxu0
  %v2226 = vld [vmem:[%s1] sm:$0xf]
  %v2227 = vld [vmem:[%s1 + $0x4] sm:$0xf]
  %v2228 = vld [vmem:[%s1 + $0x8] sm:$0xf]
  %v2229 = vld [vmem:[%s1 + $0xc] sm:$0xf]
  %v2230 = vld [vmem:[%s1 + $0x10] sm:$0xf]
  %v2231 = vld [vmem:[%s1 + $0x14] sm:$0xf]
  %v2232 = vld [vmem:[%s1 + $0x18] sm:$0xf]
  %v2233 = vld [vmem:[%s1 + $0x1c] sm:$0xf]
  %v2234 = vld [vmem:[%s1 + $0x20] sm:$0xf]
  %v2235 = vld [vmem:[%s1 + $0x24] sm:$0xf]
  %v2236 = vld [vmem:[%s1 + $0x28] sm:$0xf]
  %v2237 = vld [vmem:[%s1 + $0x2c] sm:$0xf]
  %v2238 = vld [vmem:[%s1 + $0x30] sm:$0xf]
  %v2239 = vld [vmem:[%s1 + $0x34] sm:$0xf]
  %v2240 = vld [vmem:[%s1 + $0x38] sm:$0xf]
  %v2241 = vld [vmem:[%s1 + $0x3c] sm:$0xf]
  %v2242 = vld [vmem:[%s1 + $0x40] sm:$0xf]
  %v2243 = vld [vmem:[%s1 + $0x44] sm:$0xf]
  %v2244 = vld [vmem:[%s1 + $0x48] sm:$0xf]
  %v2245 = vld [vmem:[%s1 + $0x4c] sm:$0xf]
  %v2246 = vld [vmem:[%s1 + $0x50] sm:$0xf]
  %v2247 = vld [vmem:[%s1 + $0x54] sm:$0xf]
  %v2248 = vld [vmem:[%s1 + $0x58] sm:$0xf]
  %v2249 = vld [vmem:[%s1 + $0x5c] sm:$0xf]
  %v2250 = vld [vmem:[%s1 + $0x60] sm:$0xf]
  %v2251 = vld [vmem:[%s1 + $0x64] sm:$0xf]
  %v2252 = vld [vmem:[%s1 + $0x68] sm:$0xf]
  %v2253 = vld [vmem:[%s1 + $0x6c] sm:$0xf]
  %v2254 = vld [vmem:[%s1 + $0x70] sm:$0xf]
  %v2255 = vld [vmem:[%s1 + $0x74] sm:$0xf]
  %v2256 = vld [vmem:[%s1 + $0x78] sm:$0xf]
  %v2257 = vld [vmem:[%s1 + $0x7c] sm:$0xf]
  %v2258 = vld [vmem:[%s1 + $0x80] sm:$0xf]
  %v2259 = vld [vmem:[%s1 + $0x84] sm:$0xf]
  %v2260 = vld [vmem:[%s1 + $0x88] sm:$0xf]
  %v2261 = vld [vmem:[%s1 + $0x8c] sm:$0xf]
  %v2262 = vld [vmem:[%s1 + $0x90] sm:$0xf]
  %v2263 = vld [vmem:[%s1 + $0x94] sm:$0xf]
  %v2264 = vld [vmem:[%s1 + $0x98] sm:$0xf]
  %v2265 = vld [vmem:[%s1 + $0x9c] sm:$0xf]
  %v2266 = vld [vmem:[%s1 + $0xa0] sm:$0xf]
  %v2267 = vld [vmem:[%s1 + $0xa4] sm:$0xf]
  %v2268 = vld [vmem:[%s1 + $0xa8] sm:$0xf]
  %v2269 = vld [vmem:[%s1 + $0xac] sm:$0xf]
  %v2270 = vld [vmem:[%s1 + $0xb0] sm:$0xf]
  %v2271 = vld [vmem:[%s1 + $0xb4] sm:$0xf]
  %v2272 = vld [vmem:[%s1 + $0xb8] sm:$0xf]
  %v2273 = vld [vmem:[%s1 + $0xbc] sm:$0xf]
  %v2274 = vld [vmem:[%s1 + $0xc0] sm:$0xf]
  %v2275 = vld [vmem:[%s1 + $0xc4] sm:$0xf]
  %v2276 = vld [vmem:[%s1 + $0xc8] sm:$0xf]
  %v2277 = vld [vmem:[%s1 + $0xcc] sm:$0xf]
  %v2278 = vld [vmem:[%s1 + $0xd0] sm:$0xf]
  %v2279 = vld [vmem:[%s1 + $0xd4] sm:$0xf]
  %v2280 = vld [vmem:[%s1 + $0xd8] sm:$0xf]
  %v2281 = vld [vmem:[%s1 + $0xdc] sm:$0xf]
  %v2282 = vld [vmem:[%s1 + $0xe0] sm:$0xf]
  %v2283 = vld [vmem:[%s1 + $0xe4] sm:$0xf]
  %v2284 = vld [vmem:[%s1 + $0xe8] sm:$0xf]
  %v2285 = vld [vmem:[%s1 + $0xec] sm:$0xf]
  %v2286 = vld [vmem:[%s1 + $0xf0] sm:$0xf]
  %v2287 = vld [vmem:[%s1 + $0xf4] sm:$0xf]
  %v2288 = vld [vmem:[%s1 + $0xf8] sm:$0xf]
  %v2289 = vld [vmem:[%s1 + $0xfc] sm:$0xf]
  %v2290 = vunpack.c.l.bf16 %v2226
  %v2291 = vunpack.c.l.bf16 %v2227
  %v2292 = vunpack.c.l.bf16 %v2228
  %v2293 = vunpack.c.l.bf16 %v2229
  %v2294 = vunpack.c.l.bf16 %v2230
  %v2295 = vunpack.c.l.bf16 %v2231
  %v2296 = vunpack.c.l.bf16 %v2232
  %v2297 = vunpack.c.l.bf16 %v2233
  %v2298 = vunpack.c.l.bf16 %v2234
  %v2299 = vunpack.c.l.bf16 %v2235
  %v2300 = vunpack.c.l.bf16 %v2236
  %v2301 = vunpack.c.l.bf16 %v2237
  %v2302 = vunpack.c.l.bf16 %v2238
  %v2303 = vunpack.c.l.bf16 %v2239
  %v2304 = vunpack.c.l.bf16 %v2240
  %v2305 = vunpack.c.l.bf16 %v2241
  %v2306 = vunpack.c.l.bf16 %v2242
  %v2307 = vunpack.c.l.bf16 %v2243
  %v2308 = vunpack.c.l.bf16 %v2244
  %v2309 = vunpack.c.l.bf16 %v2245
  %v2310 = vunpack.c.l.bf16 %v2246
  %v2311 = vunpack.c.l.bf16 %v2247
  %v2312 = vunpack.c.l.bf16 %v2248
  %v2313 = vunpack.c.l.bf16 %v2249
  %v2314 = vunpack.c.l.bf16 %v2250
  %v2315 = vunpack.c.l.bf16 %v2251
  %v2316 = vunpack.c.l.bf16 %v2252
  %v2317 = vunpack.c.l.bf16 %v2253
  %v2318 = vunpack.c.l.bf16 %v2254
  %v2319 = vunpack.c.l.bf16 %v2255
  %v2320 = vunpack.c.l.bf16 %v2256
  %v2321 = vunpack.c.l.bf16 %v2257
  %v2322 = vunpack.c.l.bf16 %v2258
  %v2323 = vunpack.c.l.bf16 %v2259
  %v2324 = vunpack.c.l.bf16 %v2260
  %v2325 = vunpack.c.l.bf16 %v2261
  %v2326 = vunpack.c.l.bf16 %v2262
  %v2327 = vunpack.c.l.bf16 %v2263
  %v2328 = vunpack.c.l.bf16 %v2264
  %v2329 = vunpack.c.l.bf16 %v2265
  %v2330 = vunpack.c.l.bf16 %v2266
  %v2331 = vunpack.c.l.bf16 %v2267
  %v2332 = vunpack.c.l.bf16 %v2268
  %v2333 = vunpack.c.l.bf16 %v2269
  %v2334 = vunpack.c.l.bf16 %v2270
  %v2335 = vunpack.c.l.bf16 %v2271
  %v2336 = vunpack.c.l.bf16 %v2272
  %v2337 = vunpack.c.l.bf16 %v2273
  %v2338 = vunpack.c.l.bf16 %v2274
  %v2339 = vunpack.c.l.bf16 %v2275
  %v2340 = vunpack.c.l.bf16 %v2276
  %v2341 = vunpack.c.l.bf16 %v2277
  %v2342 = vunpack.c.l.bf16 %v2278
  %v2343 = vunpack.c.l.bf16 %v2279
  %v2344 = vunpack.c.l.bf16 %v2280
  %v2345 = vunpack.c.l.bf16 %v2281
  %v2346 = vunpack.c.l.bf16 %v2282
  %v2347 = vunpack.c.l.bf16 %v2283
  %v2348 = vunpack.c.l.bf16 %v2284
  %v2349 = vunpack.c.l.bf16 %v2285
  %v2350 = vunpack.c.l.bf16 %v2286
  %v2351 = vunpack.c.l.bf16 %v2287
  %v2352 = vunpack.c.l.bf16 %v2288
  %v2353 = vunpack.c.l.bf16 %v2289
  %v2354 = vadd.f32 %v1972, %v2290
  %v2355 = vadd.f32 %v1975, %v2291
  %v2356 = vadd.f32 %v1980, %v2292
  %v2357 = vadd.f32 %v1983, %v2293
  %v2358 = vadd.f32 %v1988, %v2294
  %v2359 = vadd.f32 %v1991, %v2295
  %v2360 = vadd.f32 %v1996, %v2296
  %v2361 = vadd.f32 %v1999, %v2297
  %v2362 = vadd.f32 %v2004, %v2298
  %v2363 = vadd.f32 %v2007, %v2299
  %v2364 = vadd.f32 %v2012, %v2300
  %v2365 = vadd.f32 %v2015, %v2301
  %v2366 = vadd.f32 %v2020, %v2302
  %v2367 = vadd.f32 %v2023, %v2303
  %v2368 = vadd.f32 %v2028, %v2304
  %v2369 = vadd.f32 %v2031, %v2305
  %v2370 = vadd.f32 %v2036, %v2306
  %v2371 = vadd.f32 %v2039, %v2307
  %v2372 = vadd.f32 %v2044, %v2308
  %v2373 = vadd.f32 %v2047, %v2309
  %v2374 = vadd.f32 %v2052, %v2310
  %v2375 = vadd.f32 %v2055, %v2311
  %v2376 = vadd.f32 %v2060, %v2312
  %v2377 = vadd.f32 %v2063, %v2313
  %v2378 = vadd.f32 %v2068, %v2314
  %v2379 = vadd.f32 %v2071, %v2315
  %v2380 = vadd.f32 %v2076, %v2316
  %v2381 = vadd.f32 %v2079, %v2317
  %v2382 = vadd.f32 %v2084, %v2318
  %v2383 = vadd.f32 %v2087, %v2319
  %v2384 = vadd.f32 %v2092, %v2320
  %v2385 = vadd.f32 %v2095, %v2321
  %v2386 = vadd.f32 %v2100, %v2322
  %v2387 = vadd.f32 %v2103, %v2323
  %v2388 = vadd.f32 %v2108, %v2324
  %v2389 = vadd.f32 %v2111, %v2325
  %v2390 = vadd.f32 %v2116, %v2326
  %v2391 = vadd.f32 %v2119, %v2327
  %v2392 = vadd.f32 %v2124, %v2328
  %v2393 = vadd.f32 %v2127, %v2329
  %v2394 = vadd.f32 %v2132, %v2330
  %v2395 = vadd.f32 %v2135, %v2331
  %v2396 = vadd.f32 %v2140, %v2332
  %v2397 = vadd.f32 %v2143, %v2333
  %v2398 = vadd.f32 %v2148, %v2334
  %v2399 = vadd.f32 %v2151, %v2335
  %v2400 = vadd.f32 %v2156, %v2336
  %v2401 = vadd.f32 %v2159, %v2337
  %v2402 = vadd.f32 %v2164, %v2338
  %v2403 = vadd.f32 %v2167, %v2339
  %v2404 = vadd.f32 %v2172, %v2340
  %v2405 = vadd.f32 %v2175, %v2341
  %v2406 = vadd.f32 %v2180, %v2342
  %v2407 = vadd.f32 %v2183, %v2343
  %v2408 = vadd.f32 %v2188, %v2344
  %v2409 = vadd.f32 %v2191, %v2345
  %v2410 = vadd.f32 %v2196, %v2346
  %v2411 = vadd.f32 %v2199, %v2347
  %v2412 = vadd.f32 %v2204, %v2348
  %v2413 = vadd.f32 %v2207, %v2349
  %v2414 = vadd.f32 %v2212, %v2350
  %v2415 = vadd.f32 %v2215, %v2351
  %v2416 = vadd.f32 %v2220, %v2352
  %v2417 = vadd.f32 %v2223, %v2353
  %v2418 = vpack.c.bf16 %v2355, %v2354
  %v2419 = vpack.c.bf16 %v2357, %v2356
  %v2420 = vpack.c.bf16 %v2359, %v2358
  %v2421 = vpack.c.bf16 %v2361, %v2360
  %v2422 = vpack.c.bf16 %v2363, %v2362
  %v2423 = vpack.c.bf16 %v2365, %v2364
  %v2424 = vpack.c.bf16 %v2367, %v2366
  %v2425 = vpack.c.bf16 %v2369, %v2368
  %v2426 = vpack.c.bf16 %v2371, %v2370
  %v2427 = vpack.c.bf16 %v2373, %v2372
  %v2428 = vpack.c.bf16 %v2375, %v2374
  %v2429 = vpack.c.bf16 %v2377, %v2376
  %v2430 = vpack.c.bf16 %v2379, %v2378
  %v2431 = vpack.c.bf16 %v2381, %v2380
  %v2432 = vpack.c.bf16 %v2383, %v2382
  %v2433 = vpack.c.bf16 %v2385, %v2384
  %v2434 = vpack.c.bf16 %v2387, %v2386
  %v2435 = vpack.c.bf16 %v2389, %v2388
  %v2436 = vpack.c.bf16 %v2391, %v2390
  %v2437 = vpack.c.bf16 %v2393, %v2392
  %v2438 = vpack.c.bf16 %v2395, %v2394
  %v2439 = vpack.c.bf16 %v2397, %v2396
  %v2440 = vpack.c.bf16 %v2399, %v2398
  %v2441 = vpack.c.bf16 %v2401, %v2400
  %v2442 = vpack.c.bf16 %v2403, %v2402
  %v2443 = vpack.c.bf16 %v2405, %v2404
  %v2444 = vpack.c.bf16 %v2407, %v2406
  %v2445 = vpack.c.bf16 %v2409, %v2408
  %v2446 = vpack.c.bf16 %v2411, %v2410
  %v2447 = vpack.c.bf16 %v2413, %v2412
  %v2448 = vpack.c.bf16 %v2415, %v2414
  %v2449 = vpack.c.bf16 %v2417, %v2416
  %v2482 = vunpack.c.l.b16 %v2418
  %v2483 = vunpack.c.h.b16 %v2418
  %v2484 = vunpack.c.l.b16 %v2419
  %v2485 = vunpack.c.h.b16 %v2419
  %v2486 = vunpack.c.l.b16 %v2420
  %v2487 = vunpack.c.h.b16 %v2420
  %v2488 = vunpack.c.l.b16 %v2421
  %v2489 = vunpack.c.h.b16 %v2421
  %v2490 = vunpack.c.l.b16 %v2422
  %v2491 = vunpack.c.h.b16 %v2422
  %v2492 = vunpack.c.l.b16 %v2423
  %v2493 = vunpack.c.h.b16 %v2423
  %v2494 = vunpack.c.l.b16 %v2424
  %v2495 = vunpack.c.h.b16 %v2424
  %v2496 = vunpack.c.l.b16 %v2425
  %v2497 = vunpack.c.h.b16 %v2425
  %v2498 = vunpack.c.l.b16 %v2426
  %v2499 = vunpack.c.h.b16 %v2426
  %v2500 = vunpack.c.l.b16 %v2427
  %v2501 = vunpack.c.h.b16 %v2427
  %v2502 = vunpack.c.l.b16 %v2428
  %v2503 = vunpack.c.h.b16 %v2428
  %v2504 = vunpack.c.l.b16 %v2429
  %v2505 = vunpack.c.h.b16 %v2429
  %v2506 = vunpack.c.l.b16 %v2430
  %v2507 = vunpack.c.h.b16 %v2430
  %v2508 = vunpack.c.l.b16 %v2431
  %v2509 = vunpack.c.h.b16 %v2431
  %v2510 = vunpack.c.l.b16 %v2432
  %v2511 = vunpack.c.h.b16 %v2432
  %v2512 = vunpack.c.l.b16 %v2433
  %v2513 = vunpack.c.h.b16 %v2433
  %v2514 = vunpack.c.l.b16 %v2434
  %v2515 = vunpack.c.h.b16 %v2434
  %v2516 = vunpack.c.l.b16 %v2435
  %v2517 = vunpack.c.h.b16 %v2435
  %v2518 = vunpack.c.l.b16 %v2436
  %v2519 = vunpack.c.h.b16 %v2436
  %v2520 = vunpack.c.l.b16 %v2437
  %v2521 = vunpack.c.h.b16 %v2437
  %v2522 = vunpack.c.l.b16 %v2438
  %v2523 = vunpack.c.h.b16 %v2438
  %v2524 = vunpack.c.l.b16 %v2439
  %v2525 = vunpack.c.h.b16 %v2439
  %v2526 = vunpack.c.l.b16 %v2440
  %v2527 = vunpack.c.h.b16 %v2440
  %v2528 = vunpack.c.l.b16 %v2441
  %v2529 = vunpack.c.h.b16 %v2441
  %v2530 = vunpack.c.l.b16 %v2442
  %v2531 = vunpack.c.h.b16 %v2442
  %v2532 = vunpack.c.l.b16 %v2443
  %v2533 = vunpack.c.h.b16 %v2443
  %v2534 = vunpack.c.l.b16 %v2444
  %v2535 = vunpack.c.h.b16 %v2444
  %v2536 = vunpack.c.l.b16 %v2445
  %v2537 = vunpack.c.h.b16 %v2445
  %v2538 = vunpack.c.l.b16 %v2446
  %v2539 = vunpack.c.h.b16 %v2446
  %v2540 = vunpack.c.l.b16 %v2447
  %v2541 = vunpack.c.h.b16 %v2447
  %v2542 = vunpack.c.l.b16 %v2448
  %v2543 = vunpack.c.h.b16 %v2448
  %v2544 = vunpack.c.l.b16 %v2449
  %v2545 = vunpack.c.h.b16 %v2449
  %v2546 = vpack.c.b16 %v2482, %v2482
  %v2547 = vpack.c.b16 %v2483, %v2483
  %v2548 = vpack.c.b16 %v2484, %v2484
  %v2549 = vpack.c.b16 %v2485, %v2485
  %v2550 = vpack.c.b16 %v2486, %v2486
  %v2551 = vpack.c.b16 %v2487, %v2487
  %v2552 = vpack.c.b16 %v2488, %v2488
  %v2553 = vpack.c.b16 %v2489, %v2489
  %v2554 = vpack.c.b16 %v2490, %v2490
  %v2555 = vpack.c.b16 %v2491, %v2491
  %v2556 = vpack.c.b16 %v2492, %v2492
  %v2557 = vpack.c.b16 %v2493, %v2493
  %v2558 = vpack.c.b16 %v2494, %v2494
  %v2559 = vpack.c.b16 %v2495, %v2495
  %v2560 = vpack.c.b16 %v2496, %v2496
  %v2561 = vpack.c.b16 %v2497, %v2497
  %v2562 = vpack.c.b16 %v2498, %v2498
  %v2563 = vpack.c.b16 %v2499, %v2499
  %v2564 = vpack.c.b16 %v2500, %v2500
  %v2565 = vpack.c.b16 %v2501, %v2501
  %v2566 = vpack.c.b16 %v2502, %v2502
  %v2567 = vpack.c.b16 %v2503, %v2503
  %v2568 = vpack.c.b16 %v2504, %v2504
  %v2569 = vpack.c.b16 %v2505, %v2505
  %v2570 = vpack.c.b16 %v2506, %v2506
  %v2571 = vpack.c.b16 %v2507, %v2507
  %v2572 = vpack.c.b16 %v2508, %v2508
  %v2573 = vpack.c.b16 %v2509, %v2509
  %v2574 = vpack.c.b16 %v2510, %v2510
  %v2575 = vpack.c.b16 %v2511, %v2511
  %v2576 = vpack.c.b16 %v2512, %v2512
  %v2577 = vpack.c.b16 %v2513, %v2513
  %v2578 = vpack.c.b16 %v2514, %v2514
  %v2579 = vpack.c.b16 %v2515, %v2515
  %v2580 = vpack.c.b16 %v2516, %v2516
  %v2581 = vpack.c.b16 %v2517, %v2517
  %v2582 = vpack.c.b16 %v2518, %v2518
  %v2583 = vpack.c.b16 %v2519, %v2519
  %v2584 = vpack.c.b16 %v2520, %v2520
  %v2585 = vpack.c.b16 %v2521, %v2521
  %v2586 = vpack.c.b16 %v2522, %v2522
  %v2587 = vpack.c.b16 %v2523, %v2523
  %v2588 = vpack.c.b16 %v2524, %v2524
  %v2589 = vpack.c.b16 %v2525, %v2525
  %v2590 = vpack.c.b16 %v2526, %v2526
  %v2591 = vpack.c.b16 %v2527, %v2527
  %v2592 = vpack.c.b16 %v2528, %v2528
  %v2593 = vpack.c.b16 %v2529, %v2529
  %v2594 = vpack.c.b16 %v2530, %v2530
  %v2595 = vpack.c.b16 %v2531, %v2531
  %v2596 = vpack.c.b16 %v2532, %v2532
  %v2597 = vpack.c.b16 %v2533, %v2533
  %v2598 = vpack.c.b16 %v2534, %v2534
  %v2599 = vpack.c.b16 %v2535, %v2535
  %v2600 = vpack.c.b16 %v2536, %v2536
  %v2601 = vpack.c.b16 %v2537, %v2537
  %v2602 = vpack.c.b16 %v2538, %v2538
  %v2603 = vpack.c.b16 %v2539, %v2539
  %v2604 = vpack.c.b16 %v2540, %v2540
  %v2605 = vpack.c.b16 %v2541, %v2541
  %v2606 = vpack.c.b16 %v2542, %v2542
  %v2607 = vpack.c.b16 %v2543, %v2543
  %v2608 = vpack.c.b16 %v2544, %v2544
  %v2609 = vpack.c.b16 %v2545, %v2545
  %vm2674 = vcmask 257024
  %2675 = vst.msk [vmem:[%s7] sm:$0xf] %vm2674, %v2546
  %2676 = vst.msk [vmem:[%s7 + $0x4] sm:$0xf] %vm2674, %v2547
  %2677 = vst.msk [vmem:[%s7 + $0x8] sm:$0xf] %vm2674, %v2548
  %2678 = vst.msk [vmem:[%s7 + $0xc] sm:$0xf] %vm2674, %v2549
  %2679 = vst.msk [vmem:[%s7 + $0x10] sm:$0xf] %vm2674, %v2550
  %2680 = vst.msk [vmem:[%s7 + $0x14] sm:$0xf] %vm2674, %v2551
  %2681 = vst.msk [vmem:[%s7 + $0x18] sm:$0xf] %vm2674, %v2552
  %2682 = vst.msk [vmem:[%s7 + $0x1c] sm:$0xf] %vm2674, %v2553
  %2683 = vst.msk [vmem:[%s7 + $0x20] sm:$0xf] %vm2674, %v2554
  %2684 = vst.msk [vmem:[%s7 + $0x24] sm:$0xf] %vm2674, %v2555
  %2685 = vst.msk [vmem:[%s7 + $0x28] sm:$0xf] %vm2674, %v2556
  %2686 = vst.msk [vmem:[%s7 + $0x2c] sm:$0xf] %vm2674, %v2557
  %2687 = vst.msk [vmem:[%s7 + $0x30] sm:$0xf] %vm2674, %v2558
  %2688 = vst.msk [vmem:[%s7 + $0x34] sm:$0xf] %vm2674, %v2559
  %2689 = vst.msk [vmem:[%s7 + $0x38] sm:$0xf] %vm2674, %v2560
  %2690 = vst.msk [vmem:[%s7 + $0x3c] sm:$0xf] %vm2674, %v2561
  %2691 = vst.msk [vmem:[%s7 + $0x40] sm:$0xf] %vm2674, %v2562
  %2692 = vst.msk [vmem:[%s7 + $0x44] sm:$0xf] %vm2674, %v2563
  %2693 = vst.msk [vmem:[%s7 + $0x48] sm:$0xf] %vm2674, %v2564
  %2694 = vst.msk [vmem:[%s7 + $0x4c] sm:$0xf] %vm2674, %v2565
  %2695 = vst.msk [vmem:[%s7 + $0x50] sm:$0xf] %vm2674, %v2566
  %2696 = vst.msk [vmem:[%s7 + $0x54] sm:$0xf] %vm2674, %v2567
  %2697 = vst.msk [vmem:[%s7 + $0x58] sm:$0xf] %vm2674, %v2568
  %2698 = vst.msk [vmem:[%s7 + $0x5c] sm:$0xf] %vm2674, %v2569
  %2699 = vst.msk [vmem:[%s7 + $0x60] sm:$0xf] %vm2674, %v2570
  %2700 = vst.msk [vmem:[%s7 + $0x64] sm:$0xf] %vm2674, %v2571
  %2701 = vst.msk [vmem:[%s7 + $0x68] sm:$0xf] %vm2674, %v2572
  %2702 = vst.msk [vmem:[%s7 + $0x6c] sm:$0xf] %vm2674, %v2573
  %2703 = vst.msk [vmem:[%s7 + $0x70] sm:$0xf] %vm2674, %v2574
  %2704 = vst.msk [vmem:[%s7 + $0x74] sm:$0xf] %vm2674, %v2575
  %2705 = vst.msk [vmem:[%s7 + $0x78] sm:$0xf] %vm2674, %v2576
  %2706 = vst.msk [vmem:[%s7 + $0x7c] sm:$0xf] %vm2674, %v2577
  %2707 = vst.msk [vmem:[%s7 + $0x80] sm:$0xf] %vm2674, %v2578
  %2708 = vst.msk [vmem:[%s7 + $0x84] sm:$0xf] %vm2674, %v2579
  %2709 = vst.msk [vmem:[%s7 + $0x88] sm:$0xf] %vm2674, %v2580
  %2710 = vst.msk [vmem:[%s7 + $0x8c] sm:$0xf] %vm2674, %v2581
  %2711 = vst.msk [vmem:[%s7 + $0x90] sm:$0xf] %vm2674, %v2582
  %2712 = vst.msk [vmem:[%s7 + $0x94] sm:$0xf] %vm2674, %v2583
  %2713 = vst.msk [vmem:[%s7 + $0x98] sm:$0xf] %vm2674, %v2584
  %2714 = vst.msk [vmem:[%s7 + $0x9c] sm:$0xf] %vm2674, %v2585
  %2715 = vst.msk [vmem:[%s7 + $0xa0] sm:$0xf] %vm2674, %v2586
  %2716 = vst.msk [vmem:[%s7 + $0xa4] sm:$0xf] %vm2674, %v2587
  %2717 = vst.msk [vmem:[%s7 + $0xa8] sm:$0xf] %vm2674, %v2588
  %2718 = vst.msk [vmem:[%s7 + $0xac] sm:$0xf] %vm2674, %v2589
  %2719 = vst.msk [vmem:[%s7 + $0xb0] sm:$0xf] %vm2674, %v2590
  %2720 = vst.msk [vmem:[%s7 + $0xb4] sm:$0xf] %vm2674, %v2591
  %2721 = vst.msk [vmem:[%s7 + $0xb8] sm:$0xf] %vm2674, %v2592
  %2722 = vst.msk [vmem:[%s7 + $0xbc] sm:$0xf] %vm2674, %v2593
  %2723 = vst.msk [vmem:[%s7 + $0xc0] sm:$0xf] %vm2674, %v2594
  %2724 = vst.msk [vmem:[%s7 + $0xc4] sm:$0xf] %vm2674, %v2595
  %2725 = vst.msk [vmem:[%s7 + $0xc8] sm:$0xf] %vm2674, %v2596
  %2726 = vst.msk [vmem:[%s7 + $0xcc] sm:$0xf] %vm2674, %v2597
  %2727 = vst.msk [vmem:[%s7 + $0xd0] sm:$0xf] %vm2674, %v2598
  %2728 = vst.msk [vmem:[%s7 + $0xd4] sm:$0xf] %vm2674, %v2599
  %2729 = vst.msk [vmem:[%s7 + $0xd8] sm:$0xf] %vm2674, %v2600
  %2730 = vst.msk [vmem:[%s7 + $0xdc] sm:$0xf] %vm2674, %v2601
  %2731 = vst.msk [vmem:[%s7 + $0xe0] sm:$0xf] %vm2674, %v2602
  %2732 = vst.msk [vmem:[%s7 + $0xe4] sm:$0xf] %vm2674, %v2603
  %2733 = vst.msk [vmem:[%s7 + $0xe8] sm:$0xf] %vm2674, %v2604
  %2734 = vst.msk [vmem:[%s7 + $0xec] sm:$0xf] %vm2674, %v2605
  %2735 = vst.msk [vmem:[%s7 + $0xf0] sm:$0xf] %vm2674, %v2606
  %2736 = vst.msk [vmem:[%s7 + $0xf4] sm:$0xf] %vm2674, %v2607
  %2737 = vst.msk [vmem:[%s7 + $0xf8] sm:$0xf] %vm2674, %v2608
  %2738 = vst.msk [vmem:[%s7 + $0xfc] sm:$0xf] %vm2674, %v2609
  // Predicated region
  $region30: #{tpu_custom_call.1} parent=0 // pred_check
    _
  $region31: #{tpu_custom_call.1} parent=0 // pred_check_branch
    %2740 = sbr.rel (0) target = $region33
  $region32: #{tpu_custom_call.1} parent=0 // pred_region
    _
  $region33: #{tpu_custom_call.1} parent=0 // pred_fallthru
    _
  // Predicated region
  $region34: #{tpu_custom_call.1} parent=0 // pred_check
    _
  $region35: #{tpu_custom_call.1} parent=0 // pred_check_branch
    %2742 = sbr.rel (0) target = $region37
  $region36: #{tpu_custom_call.1} parent=0 // pred_region
    _
  $region37: #{tpu_custom_call.1} parent=0 // pred_fallthru
    _

</llo_original>
